<compile_context>
chip_gen: v6e
topology: v6e:2x2x1
jax: 0.10.0
libtpu: 0.0.40
codegen_flags: <defaults>
</compile_context>

<pallas_src>
import functools

import jax
import jax.numpy as jnp
from jax.experimental import pallas as pl
from jax.experimental.pallas import tpu as pltpu


def _sst_kernel(x_ref, wih_ref, whh_ref, bih_ref, bhhn_ref, ws_ref, bs_ref,
                out_ref, gi_ref, hs_ref, *, L, B, H):
    """Single-invocation GRU + scores head, (b, t) row order throughout.

    x_ref:    [B*L, D]   features, row = b*L + t (PyTorch contiguous order)
    wih_ref:  [D, 3H]    W_ih^T   (PyTorch gate order r, z, n)
    whh_ref:  [H, 3H]    W_hh^T
    bih_ref:  [1, 3H]    b_ih with b_hh folded in for the r and z gates
    bhhn_ref: [1, H]     b_hh for the n gate only
    ws_ref:   [H, 128]   W_scores^T zero-padded to 128 lanes
    bs_ref:   [1, 128]   b_scores zero-padded
    out_ref:  [B*L, 128] scores (lane-dense, padded), row = b*L + t
    gi_ref:   [B*L, 3H]  VMEM scratch: hoisted input projection
    hs_ref:   [B*L, H]   VMEM scratch: all hidden states
    """
    # --- Hoisted input projection for every (b, t) row: one MXU op ----------
    gi_ref[...] = (jnp.dot(x_ref[...], wih_ref[...],
                           preferred_element_type=jnp.float32)
                   + bih_ref[...])                              # [B*L, 3H]

    whh = whh_ref[...]                                          # [H, 3H]
    bhh_n = jnp.broadcast_to(bhhn_ref[...], (B, H))             # hoisted broadcast

    # --- Time recurrence: fully unrolled, one MXU op per step ----------------
    h = jnp.zeros((B, H), jnp.float32)
    for t in range(L):                      # static trip count -> full unroll
        # Gather rows {b*L + t : b} with a strided sublane load (idle vld slot).
        gi_t = gi_ref[pl.ds(t, B, stride=L), :]                 # [B, 3H]
        gh = jnp.dot(h, whh, preferred_element_type=jnp.float32)  # [B, 3H]
        # Fused r/z sigmoid: one 64-lane EUP launch per step.
        rz = jax.nn.sigmoid(gi_t[:, :2 * H] + gh[:, :2 * H])    # [B, 2H]
        r = rz[:, :H]
        z = rz[:, H:]
        n = jnp.tanh(gi_t[:, 2 * H:] + r * (gh[:, 2 * H:] + bhh_n))
        h = (1.0 - z) * n + z * h
        # Scatter h back to (b, t) rows: B=2 static 1-row stores (idle vst slot).
        for b in range(B):
            hs_ref[pl.ds(b * L + t, 1), :] = h[b:b + 1, :]

    # --- Scores head: one batched matmul, one lane-dense store ---------------
    out = (jnp.dot(hs_ref[...], ws_ref[...],
                   preferred_element_type=jnp.float32)
           + bs_ref[...])                                       # [B*L, 128]
    out_ref[...] = out.astype(out_ref.dtype)


def prepare_params(raw, lane_pad=128):
    """One-time parameter prep (hoisted out of the per-call path):
       * fold b_hh(r, z) into b_ih (exact for the r/z gates),
       * zero-pad the scores Linear to 128 output lanes for a lane-dense store.
    """
    H = raw["w_hh"].shape[0]
    K3 = raw["w_s"].shape[1]
    k3_pad = max(lane_pad, -(-K3 // lane_pad) * lane_pad)
    b_ih_fold = raw["b_ih"].at[:, :2 * H].add(raw["b_hh"][:, :2 * H])
    b_hh_n = raw["b_hh"][:, 2 * H:]
    w_s_pad = jnp.zeros((H, k3_pad), jnp.float32).at[:, :K3].set(raw["w_s"])
    b_s_pad = jnp.zeros((1, k3_pad), jnp.float32).at[:, :K3].set(raw["b_s"])
    return {
        "w_ih": raw["w_ih"], "w_hh": raw["w_hh"],
        "b_ih_fold": b_ih_fold, "b_hh_n": b_hh_n,
        "w_s_pad": w_s_pad, "b_s_pad": b_s_pad,
    }


@functools.partial(jax.jit, static_argnums=(2,))
def sst_sequence_encoder_forward(features, prep, K3):
    """features: [B, L, D] float32. Returns [B*L*K, 3] float32 (PyTorch order)."""
    B, L, D = features.shape
    H = prep["w_hh"].shape[0]
    k3_pad = prep["w_s_pad"].shape[1]

    # Contiguous reshape only — no transpose / no HBM round-trip copy.
    x2d = features.reshape(B * L, D)                 # row = b*L + t

    kernel = functools.partial(_sst_kernel, L=L, B=B, H=H)

    out_pad = pl.pallas_call(
        kernel,
        out_shape=jax.ShapeDtypeStruct((B * L, k3_pad), jnp.float32),
        in_specs=[pl.BlockSpec(memory_space=pltpu.MemorySpace.VMEM)
                  for _ in range(7)],
        out_specs=pl.BlockSpec(memory_space=pltpu.MemorySpace.VMEM),
        scratch_shapes=[pltpu.VMEM((B * L, 3 * H), jnp.float32),
                        pltpu.VMEM((B * L, H), jnp.float32)],
    )(x2d,
      prep["w_ih"], prep["w_hh"],
      prep["b_ih_fold"], prep["b_hh_n"],
      prep["w_s_pad"], prep["b_s_pad"])

    # Rows already in PyTorch (b, t) order: strip lane pad, view(-1, 3).
    return out_pad[:, :K3].reshape(B * L * (K3 // 3), 3)


def _reference_forward(features, raw):
    """Pure-JAX reference (lax.scan GRU, unfolded biases) for correctness check."""
    B, L, D = features.shape
    H = raw["w_hh"].shape[0]

    def step(h, x_t):
        gi = x_t @ raw["w_ih"] + raw["b_ih"][0]
        gh = h @ raw["w_hh"] + raw["b_hh"][0]
        r = jax.nn.sigmoid(gi[:, :H] + gh[:, :H])
        z = jax.nn.sigmoid(gi[:, H:2 * H] + gh[:, H:2 * H])
        n = jnp.tanh(gi[:, 2 * H:] + r * gh[:, 2 * H:])
        h_new = (1.0 - z) * n + z * h
        return h_new, h_new

    x_tm = jnp.transpose(features, (1, 0, 2))
    _, hs = jax.lax.scan(step, jnp.zeros((B, H), jnp.float32), x_tm)  # [L, B, H]
    hs = jnp.transpose(hs, (1, 0, 2)).reshape(B * L, H)
    out = hs @ raw["w_s"] + raw["b_s"][0]
    return out.reshape(-1, 3)


def _init_params(key, D, H, K):
    """Deterministic synthetic parameters (PyTorch GRU shapes, pre-transposed)."""
    ks = jax.random.split(key, 6)
    s = 0.1
    return {
        # weight_ih_l0 [3H, D] -> transposed [D, 3H]; gate order (r, z, n)
        "w_ih": (s * jax.random.normal(ks[0], (D, 3 * H))).astype(jnp.float32),
        "w_hh": (s * jax.random.normal(ks[1], (H, 3 * H))).astype(jnp.float32),
        "b_ih": (s * jax.random.normal(ks[2], (1, 3 * H))).astype(jnp.float32),
        "b_hh": (s * jax.random.normal(ks[3], (1, 3 * H))).astype(jnp.float32),
        # scores Linear(H, 3K): weight [3K, H] -> transposed [H, 3K]
        "w_s": (s * jax.random.normal(ks[4], (H, 3 * K))).astype(jnp.float32),
        "b_s": (s * jax.random.normal(ks[5], (1, 3 * K))).astype(jnp.float32),
    }


if __name__ == "__main__":
    B, L, D, H, K = 2, 8, 16, 32, 4

    key = jax.random.PRNGKey(0)
    k_feat, k_param = jax.random.split(key)
    features = jax.random.normal(k_feat, (B, L, D), dtype=jnp.float32)
    raw_params = _init_params(k_param, D, H, K)

    # One-time parameter prep (bias fold + lane padding) — not on the call path.
    prep = prepare_params(raw_params)

    out = sst_sequence_encoder_forward(features, prep, 3 * K)
    out = jax.block_until_ready(out)

    ref = jax.block_until_ready(_reference_forward(features, raw_params))

    assert out.shape == (B * L * K, 3), out.shape
    assert jnp.allclose(out, ref, atol=1e-5, rtol=1e-5), \
        f"max abs err {jnp.max(jnp.abs(out - ref))}"

    print("KERNEL_OK")
</pallas_src>

<mosaic_0001>
module attributes {stable_mosaic.version = 11 : i64} {
  func.func @_sst_kernel(%arg0: memref<16x16xf32, #tpu.memory_space<vmem>>, %arg1: memref<16x96xf32, #tpu.memory_space<vmem>>, %arg2: memref<32x96xf32, #tpu.memory_space<vmem>>, %arg3: memref<1x96xf32, #tpu.memory_space<vmem>>, %arg4: memref<1x32xf32, #tpu.memory_space<vmem>>, %arg5: memref<32x128xf32, #tpu.memory_space<vmem>>, %arg6: memref<1x128xf32, #tpu.memory_space<vmem>>, %arg7: memref<16x128xf32, #tpu.memory_space<vmem>>, %arg8: memref<16x96xf32, #tpu.memory_space<vmem>>, %arg9: memref<16x32xf32, #tpu.memory_space<vmem>>) attributes {dimension_semantics = [], scalar_prefetch = 0 : i64, scratch_operands = 2 : i64, tpu.core_type = #tpu.core_type<tc>} {
    %c0 = arith.constant 0 : index
    %c0_0 = arith.constant 0 : index
    %0 = vector.load %arg0[%c0, %c0_0] : memref<16x16xf32, #tpu.memory_space<vmem>>, vector<16x16xf32>
    %c0_1 = arith.constant 0 : index
    %c0_2 = arith.constant 0 : index
    %1 = vector.load %arg1[%c0_1, %c0_2] : memref<16x96xf32, #tpu.memory_space<vmem>>, vector<16x96xf32>
    %cst = arith.constant dense<0.000000e+00> : vector<16x96xf32>
    %2 = tpu.matmul %0, %1, %cst {dimension_numbers = #tpu.dot_dimension_numbers<[1], [0], [0], [1], [0, 0, 1, 1], [], []>} : vector<16x16xf32>, vector<16x96xf32>, vector<16x96xf32> -> vector<16x96xf32>
    %c0_3 = arith.constant 0 : index
    %c0_4 = arith.constant 0 : index
    %3 = vector.load %arg3[%c0_3, %c0_4] : memref<1x96xf32, #tpu.memory_space<vmem>>, vector<1x96xf32>
    %4 = vector.broadcast %3 : vector<1x96xf32> to vector<16x96xf32>
    %5 = arith.addf %2, %4 : vector<16x96xf32>
    %c0_5 = arith.constant 0 : index
    %c0_6 = arith.constant 0 : index
    %6 = vector.load %arg8[%c0_5, %c0_6] : memref<16x96xf32, #tpu.memory_space<vmem>>, vector<16x96xf32>
    tpu.vector_store %arg8[%c0_5, %c0_6], %5 {strides = array<i32>} : memref<16x96xf32, #tpu.memory_space<vmem>>, vector<16x96xf32>,
    %c0_7 = arith.constant 0 : index
    %c0_8 = arith.constant 0 : index
    %7 = vector.load %arg2[%c0_7, %c0_8] : memref<32x96xf32, #tpu.memory_space<vmem>>, vector<32x96xf32>
    %c0_9 = arith.constant 0 : index
    %c0_10 = arith.constant 0 : index
    %8 = vector.load %arg4[%c0_9, %c0_10] : memref<1x32xf32, #tpu.memory_space<vmem>>, vector<1x32xf32>
    %9 = vector.shape_cast %8 : vector<1x32xf32> to vector<1x32xf32>
    %10 = vector.broadcast %9 : vector<1x32xf32> to vector<2x32xf32>
    %cst_11 = arith.constant 0.000000e+00 : f32
    %11 = vector.broadcast %cst_11 : f32 to vector<2x32xf32>
    %c0_12 = arith.constant 0 : index
    %c0_13 = arith.constant 0 : index
    %12 = tpu.strided_load %arg8[%c0_12, %c0_13] {strides = array<i32: 8, 1>} : memref<16x96xf32, #tpu.memory_space<vmem>>, vector<2x96xf32>
    %cst_14 = arith.constant dense<0.000000e+00> : vector<2x96xf32>
    %13 = tpu.matmul %11, %7, %cst_14 {dimension_numbers = #tpu.dot_dimension_numbers<[1], [0], [0], [1], [0, 0, 1, 1], [], []>} : vector<2x32xf32>, vector<32x96xf32>, vector<2x96xf32> -> vector<2x96xf32>
    %14 = vector.extract_strided_slice %12 {offsets = [0, 0], sizes = [2, 64], strides = [1, 1]} : vector<2x96xf32> to vector<2x64xf32>
    %15 = vector.extract_strided_slice %13 {offsets = [0, 0], sizes = [2, 64], strides = [1, 1]} : vector<2x96xf32> to vector<2x64xf32>
    %16 = arith.addf %14, %15 : vector<2x64xf32>
    %17 = arith.negf %16 : vector<2x64xf32>
    %18 = math.exp %17 : vector<2x64xf32>
    %cst_15 = arith.constant 1.000000e+00 : f32
    %19 = vector.broadcast %cst_15 : f32 to vector<2x64xf32>
    %20 = arith.addf %19, %18 : vector<2x64xf32>
    %21 = arith.divf %19, %20 : vector<2x64xf32>
    %22 = vector.extract_strided_slice %21 {offsets = [0, 0], sizes = [2, 32], strides = [1, 1]} : vector<2x64xf32> to vector<2x32xf32>
    %23 = vector.extract_strided_slice %21 {offsets = [0, 32], sizes = [2, 32], strides = [1, 1]} : vector<2x64xf32> to vector<2x32xf32>
    %24 = vector.extract_strided_slice %12 {offsets = [0, 64], sizes = [2, 32], strides = [1, 1]} : vector<2x96xf32> to vector<2x32xf32>
    %25 = vector.extract_strided_slice %13 {offsets = [0, 64], sizes = [2, 32], strides = [1, 1]} : vector<2x96xf32> to vector<2x32xf32>
    %26 = arith.addf %25, %10 : vector<2x32xf32>
    %27 = arith.mulf %22, %26 : vector<2x32xf32>
    %28 = arith.addf %24, %27 : vector<2x32xf32>
    %29 = math.tanh %28 : vector<2x32xf32>
    %cst_16 = arith.constant 1.000000e+00 : f32
    %30 = vector.broadcast %cst_16 : f32 to vector<2x32xf32>
    %31 = arith.subf %30, %23 : vector<2x32xf32>
    %32 = arith.mulf %31, %29 : vector<2x32xf32>
    %33 = arith.mulf %23, %11 : vector<2x32xf32>
    %34 = arith.addf %32, %33 : vector<2x32xf32>
    %35 = vector.extract_strided_slice %34 {offsets = [0, 0], sizes = [1, 32], strides = [1, 1]} : vector<2x32xf32> to vector<1x32xf32>
    %c0_17 = arith.constant 0 : index
    %c0_18 = arith.constant 0 : index
    %36 = vector.load %arg9[%c0_17, %c0_18] : memref<16x32xf32, #tpu.memory_space<vmem>>, vector<1x32xf32>
    tpu.vector_store %arg9[%c0_17, %c0_18], %35 {strides = array<i32>} : memref<16x32xf32, #tpu.memory_space<vmem>>, vector<1x32xf32>,
    %37 = vector.extract_strided_slice %34 {offsets = [1, 0], sizes = [1, 32], strides = [1, 1]} : vector<2x32xf32> to vector<1x32xf32>
    %c8 = arith.constant 8 : index
    %c0_19 = arith.constant 0 : index
    %38 = vector.load %arg9[%c8, %c0_19] : memref<16x32xf32, #tpu.memory_space<vmem>>, vector<1x32xf32>
    tpu.vector_store %arg9[%c8, %c0_19], %37 {strides = array<i32>} : memref<16x32xf32, #tpu.memory_space<vmem>>, vector<1x32xf32>,
    %c1 = arith.constant 1 : index
    %c0_20 = arith.constant 0 : index
    %39 = tpu.strided_load %arg8[%c1, %c0_20] {strides = array<i32: 8, 1>} : memref<16x96xf32, #tpu.memory_space<vmem>>, vector<2x96xf32>
    %cst_21 = arith.constant dense<0.000000e+00> : vector<2x96xf32>
    %40 = tpu.matmul %34, %7, %cst_21 {dimension_numbers = #tpu.dot_dimension_numbers<[1], [0], [0], [1], [0, 0, 1, 1], [], []>} : vector<2x32xf32>, vector<32x96xf32>, vector<2x96xf32> -> vector<2x96xf32>
    %41 = vector.extract_strided_slice %39 {offsets = [0, 0], sizes = [2, 64], strides = [1, 1]} : vector<2x96xf32> to vector<2x64xf32>
    %42 = vector.extract_strided_slice %40 {offsets = [0, 0], sizes = [2, 64], strides = [1, 1]} : vector<2x96xf32> to vector<2x64xf32>
    %43 = arith.addf %41, %42 : vector<2x64xf32>
    %44 = arith.negf %43 : vector<2x64xf32>
    %45 = math.exp %44 : vector<2x64xf32>
    %cst_22 = arith.constant 1.000000e+00 : f32
    %46 = vector.broadcast %cst_22 : f32 to vector<2x64xf32>
    %47 = arith.addf %46, %45 : vector<2x64xf32>
    %48 = arith.divf %46, %47 : vector<2x64xf32>
    %49 = vector.extract_strided_slice %48 {offsets = [0, 0], sizes = [2, 32], strides = [1, 1]} : vector<2x64xf32> to vector<2x32xf32>
    %50 = vector.extract_strided_slice %48 {offsets = [0, 32], sizes = [2, 32], strides = [1, 1]} : vector<2x64xf32> to vector<2x32xf32>
    %51 = vector.extract_strided_slice %39 {offsets = [0, 64], sizes = [2, 32], strides = [1, 1]} : vector<2x96xf32> to vector<2x32xf32>
    %52 = vector.extract_strided_slice %40 {offsets = [0, 64], sizes = [2, 32], strides = [1, 1]} : vector<2x96xf32> to vector<2x32xf32>
    %53 = arith.addf %52, %10 : vector<2x32xf32>
    %54 = arith.mulf %49, %53 : vector<2x32xf32>
    %55 = arith.addf %51, %54 : vector<2x32xf32>
    %56 = math.tanh %55 : vector<2x32xf32>
    %cst_23 = arith.constant 1.000000e+00 : f32
    %57 = vector.broadcast %cst_23 : f32 to vector<2x32xf32>
    %58 = arith.subf %57, %50 : vector<2x32xf32>
    %59 = arith.mulf %58, %56 : vector<2x32xf32>
    %60 = arith.mulf %50, %34 : vector<2x32xf32>
    %61 = arith.addf %59, %60 : vector<2x32xf32>
    %62 = vector.extract_strided_slice %61 {offsets = [0, 0], sizes = [1, 32], strides = [1, 1]} : vector<2x32xf32> to vector<1x32xf32>
    %c1_24 = arith.constant 1 : index
    %c0_25 = arith.constant 0 : index
    %63 = vector.load %arg9[%c1_24, %c0_25] : memref<16x32xf32, #tpu.memory_space<vmem>>, vector<1x32xf32>
    tpu.vector_store %arg9[%c1_24, %c0_25], %62 {strides = array<i32>} : memref<16x32xf32, #tpu.memory_space<vmem>>, vector<1x32xf32>,
    %64 = vector.extract_strided_slice %61 {offsets = [1, 0], sizes = [1, 32], strides = [1, 1]} : vector<2x32xf32> to vector<1x32xf32>
    %c9 = arith.constant 9 : index
    %c0_26 = arith.constant 0 : index
    %65 = vector.load %arg9[%c9, %c0_26] : memref<16x32xf32, #tpu.memory_space<vmem>>, vector<1x32xf32>
    tpu.vector_store %arg9[%c9, %c0_26], %64 {strides = array<i32>} : memref<16x32xf32, #tpu.memory_space<vmem>>, vector<1x32xf32>,
    %c2 = arith.constant 2 : index
    %c0_27 = arith.constant 0 : index
    %66 = tpu.strided_load %arg8[%c2, %c0_27] {strides = array<i32: 8, 1>} : memref<16x96xf32, #tpu.memory_space<vmem>>, vector<2x96xf32>
    %cst_28 = arith.constant dense<0.000000e+00> : vector<2x96xf32>
    %67 = tpu.matmul %61, %7, %cst_28 {dimension_numbers = #tpu.dot_dimension_numbers<[1], [0], [0], [1], [0, 0, 1, 1], [], []>} : vector<2x32xf32>, vector<32x96xf32>, vector<2x96xf32> -> vector<2x96xf32>
    %68 = vector.extract_strided_slice %66 {offsets = [0, 0], sizes = [2, 64], strides = [1, 1]} : vector<2x96xf32> to vector<2x64xf32>
    %69 = vector.extract_strided_slice %67 {offsets = [0, 0], sizes = [2, 64], strides = [1, 1]} : vector<2x96xf32> to vector<2x64xf32>
    %70 = arith.addf %68, %69 : vector<2x64xf32>
    %71 = arith.negf %70 : vector<2x64xf32>
    %72 = math.exp %71 : vector<2x64xf32>
    %cst_29 = arith.constant 1.000000e+00 : f32
    %73 = vector.broadcast %cst_29 : f32 to vector<2x64xf32>
    %74 = arith.addf %73, %72 : vector<2x64xf32>
    %75 = arith.divf %73, %74 : vector<2x64xf32>
    %76 = vector.extract_strided_slice %75 {offsets = [0, 0], sizes = [2, 32], strides = [1, 1]} : vector<2x64xf32> to vector<2x32xf32>
    %77 = vector.extract_strided_slice %75 {offsets = [0, 32], sizes = [2, 32], strides = [1, 1]} : vector<2x64xf32> to vector<2x32xf32>
    %78 = vector.extract_strided_slice %66 {offsets = [0, 64], sizes = [2, 32], strides = [1, 1]} : vector<2x96xf32> to vector<2x32xf32>
    %79 = vector.extract_strided_slice %67 {offsets = [0, 64], sizes = [2, 32], strides = [1, 1]} : vector<2x96xf32> to vector<2x32xf32>
    %80 = arith.addf %79, %10 : vector<2x32xf32>
    %81 = arith.mulf %76, %80 : vector<2x32xf32>
    %82 = arith.addf %78, %81 : vector<2x32xf32>
    %83 = math.tanh %82 : vector<2x32xf32>
    %cst_30 = arith.constant 1.000000e+00 : f32
    %84 = vector.broadcast %cst_30 : f32 to vector<2x32xf32>
    %85 = arith.subf %84, %77 : vector<2x32xf32>
    %86 = arith.mulf %85, %83 : vector<2x32xf32>
    %87 = arith.mulf %77, %61 : vector<2x32xf32>
    %88 = arith.addf %86, %87 : vector<2x32xf32>
    %89 = vector.extract_strided_slice %88 {offsets = [0, 0], sizes = [1, 32], strides = [1, 1]} : vector<2x32xf32> to vector<1x32xf32>
    %c2_31 = arith.constant 2 : index
    %c0_32 = arith.constant 0 : index
    %90 = vector.load %arg9[%c2_31, %c0_32] : memref<16x32xf32, #tpu.memory_space<vmem>>, vector<1x32xf32>
    tpu.vector_store %arg9[%c2_31, %c0_32], %89 {strides = array<i32>} : memref<16x32xf32, #tpu.memory_space<vmem>>, vector<1x32xf32>,
    %91 = vector.extract_strided_slice %88 {offsets = [1, 0], sizes = [1, 32], strides = [1, 1]} : vector<2x32xf32> to vector<1x32xf32>
    %c10 = arith.constant 10 : index
    %c0_33 = arith.constant 0 : index
    %92 = vector.load %arg9[%c10, %c0_33] : memref<16x32xf32, #tpu.memory_space<vmem>>, vector<1x32xf32>
    tpu.vector_store %arg9[%c10, %c0_33], %91 {strides = array<i32>} : memref<16x32xf32, #tpu.memory_space<vmem>>, vector<1x32xf32>,
    %c3 = arith.constant 3 : index
    %c0_34 = arith.constant 0 : index
    %93 = tpu.strided_load %arg8[%c3, %c0_34] {strides = array<i32: 8, 1>} : memref<16x96xf32, #tpu.memory_space<vmem>>, vector<2x96xf32>
    %cst_35 = arith.constant dense<0.000000e+00> : vector<2x96xf32>
    %94 = tpu.matmul %88, %7, %cst_35 {dimension_numbers = #tpu.dot_dimension_numbers<[1], [0], [0], [1], [0, 0, 1, 1], [], []>} : vector<2x32xf32>, vector<32x96xf32>, vector<2x96xf32> -> vector<2x96xf32>
    %95 = vector.extract_strided_slice %93 {offsets = [0, 0], sizes = [2, 64], strides = [1, 1]} : vector<2x96xf32> to vector<2x64xf32>
    %96 = vector.extract_strided_slice %94 {offsets = [0, 0], sizes = [2, 64], strides = [1, 1]} : vector<2x96xf32> to vector<2x64xf32>
    %97 = arith.addf %95, %96 : vector<2x64xf32>
    %98 = arith.negf %97 : vector<2x64xf32>
    %99 = math.exp %98 : vector<2x64xf32>
    %cst_36 = arith.constant 1.000000e+00 : f32
    %100 = vector.broadcast %cst_36 : f32 to vector<2x64xf32>
    %101 = arith.addf %100, %99 : vector<2x64xf32>
    %102 = arith.divf %100, %101 : vector<2x64xf32>
    %103 = vector.extract_strided_slice %102 {offsets = [0, 0], sizes = [2, 32], strides = [1, 1]} : vector<2x64xf32> to vector<2x32xf32>
    %104 = vector.extract_strided_slice %102 {offsets = [0, 32], sizes = [2, 32], strides = [1, 1]} : vector<2x64xf32> to vector<2x32xf32>
    %105 = vector.extract_strided_slice %93 {offsets = [0, 64], sizes = [2, 32], strides = [1, 1]} : vector<2x96xf32> to vector<2x32xf32>
    %106 = vector.extract_strided_slice %94 {offsets = [0, 64], sizes = [2, 32], strides = [1, 1]} : vector<2x96xf32> to vector<2x32xf32>
    %107 = arith.addf %106, %10 : vector<2x32xf32>
    %108 = arith.mulf %103, %107 : vector<2x32xf32>
    %109 = arith.addf %105, %108 : vector<2x32xf32>
    %110 = math.tanh %109 : vector<2x32xf32>
    %cst_37 = arith.constant 1.000000e+00 : f32
    %111 = vector.broadcast %cst_37 : f32 to vector<2x32xf32>
    %112 = arith.subf %111, %104 : vector<2x32xf32>
    %113 = arith.mulf %112, %110 : vector<2x32xf32>
    %114 = arith.mulf %104, %88 : vector<2x32xf32>
    %115 = arith.addf %113, %114 : vector<2x32xf32>
    %116 = vector.extract_strided_slice %115 {offsets = [0, 0], sizes = [1, 32], strides = [1, 1]} : vector<2x32xf32> to vector<1x32xf32>
    %c3_38 = arith.constant 3 : index
    %c0_39 = arith.constant 0 : index
    %117 = vector.load %arg9[%c3_38, %c0_39] : memref<16x32xf32, #tpu.memory_space<vmem>>, vector<1x32xf32>
    tpu.vector_store %arg9[%c3_38, %c0_39], %116 {strides = array<i32>} : memref<16x32xf32, #tpu.memory_space<vmem>>, vector<1x32xf32>,
    %118 = vector.extract_strided_slice %115 {offsets = [1, 0], sizes = [1, 32], strides = [1, 1]} : vector<2x32xf32> to vector<1x32xf32>
    %c11 = arith.constant 11 : index
    %c0_40 = arith.constant 0 : index
    %119 = vector.load %arg9[%c11, %c0_40] : memref<16x32xf32, #tpu.memory_space<vmem>>, vector<1x32xf32>
    tpu.vector_store %arg9[%c11, %c0_40], %118 {strides = array<i32>} : memref<16x32xf32, #tpu.memory_space<vmem>>, vector<1x32xf32>,
    %c4 = arith.constant 4 : index
    %c0_41 = arith.constant 0 : index
    %120 = tpu.strided_load %arg8[%c4, %c0_41] {strides = array<i32: 8, 1>} : memref<16x96xf32, #tpu.memory_space<vmem>>, vector<2x96xf32>
    %cst_42 = arith.constant dense<0.000000e+00> : vector<2x96xf32>
    %121 = tpu.matmul %115, %7, %cst_42 {dimension_numbers = #tpu.dot_dimension_numbers<[1], [0], [0], [1], [0, 0, 1, 1], [], []>} : vector<2x32xf32>, vector<32x96xf32>, vector<2x96xf32> -> vector<2x96xf32>
    %122 = vector.extract_strided_slice %120 {offsets = [0, 0], sizes = [2, 64], strides = [1, 1]} : vector<2x96xf32> to vector<2x64xf32>
    %123 = vector.extract_strided_slice %121 {offsets = [0, 0], sizes = [2, 64], strides = [1, 1]} : vector<2x96xf32> to vector<2x64xf32>
    %124 = arith.addf %122, %123 : vector<2x64xf32>
    %125 = arith.negf %124 : vector<2x64xf32>
    %126 = math.exp %125 : vector<2x64xf32>
    %cst_43 = arith.constant 1.000000e+00 : f32
    %127 = vector.broadcast %cst_43 : f32 to vector<2x64xf32>
    %128 = arith.addf %127, %126 : vector<2x64xf32>
    %129 = arith.divf %127, %128 : vector<2x64xf32>
    %130 = vector.extract_strided_slice %129 {offsets = [0, 0], sizes = [2, 32], strides = [1, 1]} : vector<2x64xf32> to vector<2x32xf32>
    %131 = vector.extract_strided_slice %129 {offsets = [0, 32], sizes = [2, 32], strides = [1, 1]} : vector<2x64xf32> to vector<2x32xf32>
    %132 = vector.extract_strided_slice %120 {offsets = [0, 64], sizes = [2, 32], strides = [1, 1]} : vector<2x96xf32> to vector<2x32xf32>
    %133 = vector.extract_strided_slice %121 {offsets = [0, 64], sizes = [2, 32], strides = [1, 1]} : vector<2x96xf32> to vector<2x32xf32>
    %134 = arith.addf %133, %10 : vector<2x32xf32>
    %135 = arith.mulf %130, %134 : vector<2x32xf32>
    %136 = arith.addf %132, %135 : vector<2x32xf32>
    %137 = math.tanh %136 : vector<2x32xf32>
    %cst_44 = arith.constant 1.000000e+00 : f32
    %138 = vector.broadcast %cst_44 : f32 to vector<2x32xf32>
    %139 = arith.subf %138, %131 : vector<2x32xf32>
    %140 = arith.mulf %139, %137 : vector<2x32xf32>
    %141 = arith.mulf %131, %115 : vector<2x32xf32>
    %142 = arith.addf %140, %141 : vector<2x32xf32>
    %143 = vector.extract_strided_slice %142 {offsets = [0, 0], sizes = [1, 32], strides = [1, 1]} : vector<2x32xf32> to vector<1x32xf32>
    %c4_45 = arith.constant 4 : index
    %c0_46 = arith.constant 0 : index
    %144 = vector.load %arg9[%c4_45, %c0_46] : memref<16x32xf32, #tpu.memory_space<vmem>>, vector<1x32xf32>
    tpu.vector_store %arg9[%c4_45, %c0_46], %143 {strides = array<i32>} : memref<16x32xf32, #tpu.memory_space<vmem>>, vector<1x32xf32>,
    %145 = vector.extract_strided_slice %142 {offsets = [1, 0], sizes = [1, 32], strides = [1, 1]} : vector<2x32xf32> to vector<1x32xf32>
    %c12 = arith.constant 12 : index
    %c0_47 = arith.constant 0 : index
    %146 = vector.load %arg9[%c12, %c0_47] : memref<16x32xf32, #tpu.memory_space<vmem>>, vector<1x32xf32>
    tpu.vector_store %arg9[%c12, %c0_47], %145 {strides = array<i32>} : memref<16x32xf32, #tpu.memory_space<vmem>>, vector<1x32xf32>,
    %c5 = arith.constant 5 : index
    %c0_48 = arith.constant 0 : index
    %147 = tpu.strided_load %arg8[%c5, %c0_48] {strides = array<i32: 8, 1>} : memref<16x96xf32, #tpu.memory_space<vmem>>, vector<2x96xf32>
    %cst_49 = arith.constant dense<0.000000e+00> : vector<2x96xf32>
    %148 = tpu.matmul %142, %7, %cst_49 {dimension_numbers = #tpu.dot_dimension_numbers<[1], [0], [0], [1], [0, 0, 1, 1], [], []>} : vector<2x32xf32>, vector<32x96xf32>, vector<2x96xf32> -> vector<2x96xf32>
    %149 = vector.extract_strided_slice %147 {offsets = [0, 0], sizes = [2, 64], strides = [1, 1]} : vector<2x96xf32> to vector<2x64xf32>
    %150 = vector.extract_strided_slice %148 {offsets = [0, 0], sizes = [2, 64], strides = [1, 1]} : vector<2x96xf32> to vector<2x64xf32>
    %151 = arith.addf %149, %150 : vector<2x64xf32>
    %152 = arith.negf %151 : vector<2x64xf32>
    %153 = math.exp %152 : vector<2x64xf32>
    %cst_50 = arith.constant 1.000000e+00 : f32
    %154 = vector.broadcast %cst_50 : f32 to vector<2x64xf32>
    %155 = arith.addf %154, %153 : vector<2x64xf32>
    %156 = arith.divf %154, %155 : vector<2x64xf32>
    %157 = vector.extract_strided_slice %156 {offsets = [0, 0], sizes = [2, 32], strides = [1, 1]} : vector<2x64xf32> to vector<2x32xf32>
    %158 = vector.extract_strided_slice %156 {offsets = [0, 32], sizes = [2, 32], strides = [1, 1]} : vector<2x64xf32> to vector<2x32xf32>
    %159 = vector.extract_strided_slice %147 {offsets = [0, 64], sizes = [2, 32], strides = [1, 1]} : vector<2x96xf32> to vector<2x32xf32>
    %160 = vector.extract_strided_slice %148 {offsets = [0, 64], sizes = [2, 32], strides = [1, 1]} : vector<2x96xf32> to vector<2x32xf32>
    %161 = arith.addf %160, %10 : vector<2x32xf32>
    %162 = arith.mulf %157, %161 : vector<2x32xf32>
    %163 = arith.addf %159, %162 : vector<2x32xf32>
    %164 = math.tanh %163 : vector<2x32xf32>
    %cst_51 = arith.constant 1.000000e+00 : f32
    %165 = vector.broadcast %cst_51 : f32 to vector<2x32xf32>
    %166 = arith.subf %165, %158 : vector<2x32xf32>
    %167 = arith.mulf %166, %164 : vector<2x32xf32>
    %168 = arith.mulf %158, %142 : vector<2x32xf32>
    %169 = arith.addf %167, %168 : vector<2x32xf32>
    %170 = vector.extract_strided_slice %169 {offsets = [0, 0], sizes = [1, 32], strides = [1, 1]} : vector<2x32xf32> to vector<1x32xf32>
    %c5_52 = arith.constant 5 : index
    %c0_53 = arith.constant 0 : index
    %171 = vector.load %arg9[%c5_52, %c0_53] : memref<16x32xf32, #tpu.memory_space<vmem>>, vector<1x32xf32>
    tpu.vector_store %arg9[%c5_52, %c0_53], %170 {strides = array<i32>} : memref<16x32xf32, #tpu.memory_space<vmem>>, vector<1x32xf32>,
    %172 = vector.extract_strided_slice %169 {offsets = [1, 0], sizes = [1, 32], strides = [1, 1]} : vector<2x32xf32> to vector<1x32xf32>
    %c13 = arith.constant 13 : index
    %c0_54 = arith.constant 0 : index
    %173 = vector.load %arg9[%c13, %c0_54] : memref<16x32xf32, #tpu.memory_space<vmem>>, vector<1x32xf32>
    tpu.vector_store %arg9[%c13, %c0_54], %172 {strides = array<i32>} : memref<16x32xf32, #tpu.memory_space<vmem>>, vector<1x32xf32>,
    %c6 = arith.constant 6 : index
    %c0_55 = arith.constant 0 : index
    %174 = tpu.strided_load %arg8[%c6, %c0_55] {strides = array<i32: 8, 1>} : memref<16x96xf32, #tpu.memory_space<vmem>>, vector<2x96xf32>
    %cst_56 = arith.constant dense<0.000000e+00> : vector<2x96xf32>
    %175 = tpu.matmul %169, %7, %cst_56 {dimension_numbers = #tpu.dot_dimension_numbers<[1], [0], [0], [1], [0, 0, 1, 1], [], []>} : vector<2x32xf32>, vector<32x96xf32>, vector<2x96xf32> -> vector<2x96xf32>
    %176 = vector.extract_strided_slice %174 {offsets = [0, 0], sizes = [2, 64], strides = [1, 1]} : vector<2x96xf32> to vector<2x64xf32>
    %177 = vector.extract_strided_slice %175 {offsets = [0, 0], sizes = [2, 64], strides = [1, 1]} : vector<2x96xf32> to vector<2x64xf32>
    %178 = arith.addf %176, %177 : vector<2x64xf32>
    %179 = arith.negf %178 : vector<2x64xf32>
    %180 = math.exp %179 : vector<2x64xf32>
    %cst_57 = arith.constant 1.000000e+00 : f32
    %181 = vector.broadcast %cst_57 : f32 to vector<2x64xf32>
    %182 = arith.addf %181, %180 : vector<2x64xf32>
    %183 = arith.divf %181, %182 : vector<2x64xf32>
    %184 = vector.extract_strided_slice %183 {offsets = [0, 0], sizes = [2, 32], strides = [1, 1]} : vector<2x64xf32> to vector<2x32xf32>
    %185 = vector.extract_strided_slice %183 {offsets = [0, 32], sizes = [2, 32], strides = [1, 1]} : vector<2x64xf32> to vector<2x32xf32>
    %186 = vector.extract_strided_slice %174 {offsets = [0, 64], sizes = [2, 32], strides = [1, 1]} : vector<2x96xf32> to vector<2x32xf32>
    %187 = vector.extract_strided_slice %175 {offsets = [0, 64], sizes = [2, 32], strides = [1, 1]} : vector<2x96xf32> to vector<2x32xf32>
    %188 = arith.addf %187, %10 : vector<2x32xf32>
    %189 = arith.mulf %184, %188 : vector<2x32xf32>
    %190 = arith.addf %186, %189 : vector<2x32xf32>
    %191 = math.tanh %190 : vector<2x32xf32>
    %cst_58 = arith.constant 1.000000e+00 : f32
    %192 = vector.broadcast %cst_58 : f32 to vector<2x32xf32>
    %193 = arith.subf %192, %185 : vector<2x32xf32>
    %194 = arith.mulf %193, %191 : vector<2x32xf32>
    %195 = arith.mulf %185, %169 : vector<2x32xf32>
    %196 = arith.addf %194, %195 : vector<2x32xf32>
    %197 = vector.extract_strided_slice %196 {offsets = [0, 0], sizes = [1, 32], strides = [1, 1]} : vector<2x32xf32> to vector<1x32xf32>
    %c6_59 = arith.constant 6 : index
    %c0_60 = arith.constant 0 : index
    %198 = vector.load %arg9[%c6_59, %c0_60] : memref<16x32xf32, #tpu.memory_space<vmem>>, vector<1x32xf32>
    tpu.vector_store %arg9[%c6_59, %c0_60], %197 {strides = array<i32>} : memref<16x32xf32, #tpu.memory_space<vmem>>, vector<1x32xf32>,
    %199 = vector.extract_strided_slice %196 {offsets = [1, 0], sizes = [1, 32], strides = [1, 1]} : vector<2x32xf32> to vector<1x32xf32>
    %c14 = arith.constant 14 : index
    %c0_61 = arith.constant 0 : index
    %200 = vector.load %arg9[%c14, %c0_61] : memref<16x32xf32, #tpu.memory_space<vmem>>, vector<1x32xf32>
    tpu.vector_store %arg9[%c14, %c0_61], %199 {strides = array<i32>} : memref<16x32xf32, #tpu.memory_space<vmem>>, vector<1x32xf32>,
    %c7 = arith.constant 7 : index
    %c0_62 = arith.constant 0 : index
    %201 = tpu.strided_load %arg8[%c7, %c0_62] {strides = array<i32: 8, 1>} : memref<16x96xf32, #tpu.memory_space<vmem>>, vector<2x96xf32>
    %cst_63 = arith.constant dense<0.000000e+00> : vector<2x96xf32>
    %202 = tpu.matmul %196, %7, %cst_63 {dimension_numbers = #tpu.dot_dimension_numbers<[1], [0], [0], [1], [0, 0, 1, 1], [], []>} : vector<2x32xf32>, vector<32x96xf32>, vector<2x96xf32> -> vector<2x96xf32>
    %203 = vector.extract_strided_slice %201 {offsets = [0, 0], sizes = [2, 64], strides = [1, 1]} : vector<2x96xf32> to vector<2x64xf32>
    %204 = vector.extract_strided_slice %202 {offsets = [0, 0], sizes = [2, 64], strides = [1, 1]} : vector<2x96xf32> to vector<2x64xf32>
    %205 = arith.addf %203, %204 : vector<2x64xf32>
    %206 = arith.negf %205 : vector<2x64xf32>
    %207 = math.exp %206 : vector<2x64xf32>
    %cst_64 = arith.constant 1.000000e+00 : f32
    %208 = vector.broadcast %cst_64 : f32 to vector<2x64xf32>
    %209 = arith.addf %208, %207 : vector<2x64xf32>
    %210 = arith.divf %208, %209 : vector<2x64xf32>
    %211 = vector.extract_strided_slice %210 {offsets = [0, 0], sizes = [2, 32], strides = [1, 1]} : vector<2x64xf32> to vector<2x32xf32>
    %212 = vector.extract_strided_slice %210 {offsets = [0, 32], sizes = [2, 32], strides = [1, 1]} : vector<2x64xf32> to vector<2x32xf32>
    %213 = vector.extract_strided_slice %201 {offsets = [0, 64], sizes = [2, 32], strides = [1, 1]} : vector<2x96xf32> to vector<2x32xf32>
    %214 = vector.extract_strided_slice %202 {offsets = [0, 64], sizes = [2, 32], strides = [1, 1]} : vector<2x96xf32> to vector<2x32xf32>
    %215 = arith.addf %214, %10 : vector<2x32xf32>
    %216 = arith.mulf %211, %215 : vector<2x32xf32>
    %217 = arith.addf %213, %216 : vector<2x32xf32>
    %218 = math.tanh %217 : vector<2x32xf32>
    %cst_65 = arith.constant 1.000000e+00 : f32
    %219 = vector.broadcast %cst_65 : f32 to vector<2x32xf32>
    %220 = arith.subf %219, %212 : vector<2x32xf32>
    %221 = arith.mulf %220, %218 : vector<2x32xf32>
    %222 = arith.mulf %212, %196 : vector<2x32xf32>
    %223 = arith.addf %221, %222 : vector<2x32xf32>
    %224 = vector.extract_strided_slice %223 {offsets = [0, 0], sizes = [1, 32], strides = [1, 1]} : vector<2x32xf32> to vector<1x32xf32>
    %c7_66 = arith.constant 7 : index
    %c0_67 = arith.constant 0 : index
    %225 = vector.load %arg9[%c7_66, %c0_67] : memref<16x32xf32, #tpu.memory_space<vmem>>, vector<1x32xf32>
    tpu.vector_store %arg9[%c7_66, %c0_67], %224 {strides = array<i32>} : memref<16x32xf32, #tpu.memory_space<vmem>>, vector<1x32xf32>,
    %226 = vector.extract_strided_slice %223 {offsets = [1, 0], sizes = [1, 32], strides = [1, 1]} : vector<2x32xf32> to vector<1x32xf32>
    %c15 = arith.constant 15 : index
    %c0_68 = arith.constant 0 : index
    %227 = vector.load %arg9[%c15, %c0_68] : memref<16x32xf32, #tpu.memory_space<vmem>>, vector<1x32xf32>
    tpu.vector_store %arg9[%c15, %c0_68], %226 {strides = array<i32>} : memref<16x32xf32, #tpu.memory_space<vmem>>, vector<1x32xf32>,
    %c0_69 = arith.constant 0 : index
    %c0_70 = arith.constant 0 : index
    %228 = vector.load %arg9[%c0_69, %c0_70] : memref<16x32xf32, #tpu.memory_space<vmem>>, vector<16x32xf32>
    %c0_71 = arith.constant 0 : index
    %c0_72 = arith.constant 0 : index
    %229 = vector.load %arg5[%c0_71, %c0_72] : memref<32x128xf32, #tpu.memory_space<vmem>>, vector<32x128xf32>
    %cst_73 = arith.constant dense<0.000000e+00> : vector<16x128xf32>
    %230 = tpu.matmul %228, %229, %cst_73 {dimension_numbers = #tpu.dot_dimension_numbers<[1], [0], [0], [1], [0, 0, 1, 1], [], []>} : vector<16x32xf32>, vector<32x128xf32>, vector<16x128xf32> -> vector<16x128xf32>
    %c0_74 = arith.constant 0 : index
    %c0_75 = arith.constant 0 : index
    %231 = vector.load %arg6[%c0_74, %c0_75] : memref<1x128xf32, #tpu.memory_space<vmem>>, vector<1x128xf32>
    %232 = vector.broadcast %231 : vector<1x128xf32> to vector<16x128xf32>
    %233 = arith.addf %230, %232 : vector<16x128xf32>
    %c0_76 = arith.constant 0 : index
    %c0_77 = arith.constant 0 : index
    %234 = vector.load %arg7[%c0_76, %c0_77] : memref<16x128xf32, #tpu.memory_space<vmem>>, vector<16x128xf32>
    tpu.vector_store %arg7[%c0_76, %c0_77], %233 {strides = array<i32>} : memref<16x128xf32, #tpu.memory_space<vmem>>, vector<16x128xf32>,
    return
  }
}

</mosaic_0001>

<llo_original>
// kernel: sst_sequence_encoder_forward.1
$region0: #{sst_sequence_encoder_forward.1}
  #allocation0 [shape = 'u32[]', space=smem, size = 0x4, offset = 0x4, fixed_abs, tag = 'smem constant byte address 0x4 - core index']
  #allocation1 [shape = 'u32[144,128]{1,0:T(1,128)}', space=vmem, size = 0x12000, scoped, tag = 'internal scratch']
  #allocation2 [shape = 'f32[16,96]{1,0:T(8,128)}', space=vmem, size = 0x2000, scoped, tag = 'scratch operand']
  #allocation3 [shape = 'f32[16,32]{1,0:T(8,128)}', space=vmem, size = 0x2000, scoped, tag = 'scratch operand']
  %s0 = inlined_call_operand.hbm [shape: f32[16,16], index: 0, kind: input, shape index: {}]
  %s1 = inlined_call_operand.hbm [shape: f32[16,96], index: 1, kind: input, shape index: {}]
  %s2 = inlined_call_operand.hbm [shape: f32[32,96], index: 2, kind: input, shape index: {}]
  %s3 = inlined_call_operand.vmem [shape: f32[1,96], index: 3, kind: input, shape index: {}]
  %s4 = inlined_call_operand.vmem [shape: f32[1,32], index: 4, kind: input, shape index: {}]
  %s5 = inlined_call_operand.hbm [shape: f32[32,128], index: 5, kind: input, shape index: {}]
  %s6 = inlined_call_operand.vmem [shape: f32[1,128], index: 6, kind: input, shape index: {}]
  %s7 = inlined_call_operand.vmem [shape: f32[16,128], index: 7, kind: output, shape index: {}]
  %s8 = sld [smem:[#allocation0]]
  $region54: #{sst_sequence_encoder_forward.1} parent=0
    _
  %s10 = ssub.s32 1, %s8
  %s11 = scalar_select 0, %s10, %s8
  $region1: #{sst_sequence_encoder_forward.1} parent=0
    #allocation4 [shape = 'u8[8192]{0}', space=vmem, size = 0x2000, scoped, tag = 'input window, operand 0, single buffered']
    #allocation5 [shape = 's32[1]{0}', space=sflag, size = 0x4, scoped, tag = 'scoped memory for sst_sequence_encoder_forward.1']
    #allocation6 [shape = 'u8[8192]{0}', space=vmem, size = 0x2000, scoped, tag = 'input window, operand 1, single buffered']
    #allocation7 [shape = 's32[1]{0}', space=sflag, size = 0x4, scoped, tag = 'scoped memory for sst_sequence_encoder_forward.1']
    #allocation8 [shape = 'u8[16384]{0}', space=vmem, size = 0x4000, scoped, tag = 'input window, operand 2, single buffered']
    #allocation9 [shape = 'u8[16384]{0}', space=vmem, size = 0x4000, scoped, tag = 'input window, operand 5, single buffered']
    #allocation10 [shape = 's32[1]{0}', space=sflag, size = 0x4, scoped, tag = 'scoped memory for sst_sequence_encoder_forward.1']
    %12 = vsyncpa [#allocation5], 0
    %13 = vsyncpa [#allocation7], 0
    %14 = vsyncpa [#allocation10], 0
    // Predicated region
    $region2: #{sst_sequence_encoder_forward.1} parent=1 // pred_check
      _
    $region3: #{sst_sequence_encoder_forward.1} parent=1 // pred_check_branch
      %16 = sbr.rel (0) target = $region5
    $region4: #{sst_sequence_encoder_forward.1} parent=1 // pred_region
      %s18 = ssub.s32 256, 256
      %19 = vsyncadd [#allocation5], %s18
      %s20 = sshll.u32 [#allocation4], 4
      %s21 = int_to_ptr.vmem [resolvable:$true] %s20
      %26 = dma.hbm_to_vmem [thread:$0]  %s0, 256, %s21, [#allocation5], 128, 128, 8
    $region5: #{sst_sequence_encoder_forward.1} parent=1 // pred_fallthru
      _
    // Predicated region
    $region6: #{sst_sequence_encoder_forward.1} parent=1 // pred_check
      _
    $region7: #{sst_sequence_encoder_forward.1} parent=1 // pred_check_branch
      %28 = sbr.rel (0) target = $region9
    $region8: #{sst_sequence_encoder_forward.1} parent=1 // pred_region
      %s30 = ssub.s32 256, 256
      %31 = vsyncadd [#allocation7], %s30
      %s32 = sshll.u32 [#allocation6], 4
      %s33 = int_to_ptr.vmem [resolvable:$true] %s32
      %38 = dma.hbm_to_vmem [thread:$0]  %s1, 256, %s33, [#allocation7], 128, 128, 8
    $region9: #{sst_sequence_encoder_forward.1} parent=1 // pred_fallthru
      _
    // Predicated region
    $region10: #{sst_sequence_encoder_forward.1} parent=1 // pred_check
      _
    $region11: #{sst_sequence_encoder_forward.1} parent=1 // pred_check_branch
      %40 = sbr.rel (0) target = $region13
    $region12: #{sst_sequence_encoder_forward.1} parent=1 // pred_region
      %s42 = ssub.s32 512, 512
      %43 = vsyncadd [#allocation7], %s42
      %s44 = sshll.u32 [#allocation8], 4
      %s45 = int_to_ptr.vmem [resolvable:$true] %s44
      %50 = dma.hbm_to_vmem [thread:$0]  %s2, 512, %s45, [#allocation7], 128, 128, 8
    $region13: #{sst_sequence_encoder_forward.1} parent=1 // pred_fallthru
      _
    // Predicated region
    $region14: #{sst_sequence_encoder_forward.1} parent=1 // pred_check
      _
    $region15: #{sst_sequence_encoder_forward.1} parent=1 // pred_check_branch
      %52 = sbr.rel (0) target = $region17
    $region16: #{sst_sequence_encoder_forward.1} parent=1 // pred_region
      _
    $region17: #{sst_sequence_encoder_forward.1} parent=1 // pred_fallthru
      _
    // Predicated region
    $region18: #{sst_sequence_encoder_forward.1} parent=1 // pred_check
      _
    $region19: #{sst_sequence_encoder_forward.1} parent=1 // pred_check_branch
      %54 = sbr.rel (0) target = $region21
    $region20: #{sst_sequence_encoder_forward.1} parent=1 // pred_region
      _
    $region21: #{sst_sequence_encoder_forward.1} parent=1 // pred_fallthru
      _
    // Predicated region
    $region22: #{sst_sequence_encoder_forward.1} parent=1 // pred_check
      _
    $region23: #{sst_sequence_encoder_forward.1} parent=1 // pred_check_branch
      %56 = sbr.rel (0) target = $region25
    $region24: #{sst_sequence_encoder_forward.1} parent=1 // pred_region
      %s58 = ssub.s32 512, 512
      %59 = vsyncadd [#allocation10], %s58
      %s60 = sshll.u32 [#allocation9], 4
      %s61 = int_to_ptr.vmem [resolvable:$true] %s60
      %66 = dma.hbm_to_vmem [thread:$0]  %s5, 512, %s61, [#allocation10], 128, 128, 8
    $region25: #{sst_sequence_encoder_forward.1} parent=1 // pred_fallthru
      _
    // Predicated region
    $region26: #{sst_sequence_encoder_forward.1} parent=1 // pred_check
      _
    $region27: #{sst_sequence_encoder_forward.1} parent=1 // pred_check_branch
      %68 = sbr.rel (0) target = $region29
    $region28: #{sst_sequence_encoder_forward.1} parent=1 // pred_region
      _
    $region29: #{sst_sequence_encoder_forward.1} parent=1 // pred_fallthru
      _
    // Predicated region
    $region30: #{sst_sequence_encoder_forward.1} parent=1 // pred_check
      _
    $region31: #{sst_sequence_encoder_forward.1} parent=1 // pred_check_branch
      %70 = sbr.rel (0) target = $region33
    $region32: #{sst_sequence_encoder_forward.1} parent=1 // pred_region
      %71 = dma.done [#allocation5], 256
    $region33: #{sst_sequence_encoder_forward.1} parent=1 // pred_fallthru
      _
    // Predicated region
    $region34: #{sst_sequence_encoder_forward.1} parent=1 // pred_check
      _
    $region35: #{sst_sequence_encoder_forward.1} parent=1 // pred_check_branch
      %73 = sbr.rel (0) target = $region37
    $region36: #{sst_sequence_encoder_forward.1} parent=1 // pred_region
      %74 = dma.done [#allocation7], 256
    $region37: #{sst_sequence_encoder_forward.1} parent=1 // pred_fallthru
      _
    // Predicated region
    $region38: #{sst_sequence_encoder_forward.1} parent=1 // pred_check
      _
    $region39: #{sst_sequence_encoder_forward.1} parent=1 // pred_check_branch
      %76 = sbr.rel (0) target = $region41
    $region40: #{sst_sequence_encoder_forward.1} parent=1 // pred_region
      %77 = dma.done [#allocation7], 512
    $region41: #{sst_sequence_encoder_forward.1} parent=1 // pred_fallthru
      _
    // Predicated region
    $region42: #{sst_sequence_encoder_forward.1} parent=1 // pred_check
      _
    $region43: #{sst_sequence_encoder_forward.1} parent=1 // pred_check_branch
      %79 = sbr.rel (0) target = $region45
    $region44: #{sst_sequence_encoder_forward.1} parent=1 // pred_region
      %80 = dma.done [#allocation10], 512
    $region45: #{sst_sequence_encoder_forward.1} parent=1 // pred_fallthru
      _
    %v81 = vld [vmem:[#allocation4] sm:$0xff]
    %v82 = vld [vmem:[#allocation4 + $0x8] sm:$0xff]
    %v83 = vld [vmem:[#allocation6] sm:$0xff]
    %v84 = vld [vmem:[#allocation6 + $0x8] sm:$0xff]
    %v85 = vld [vmem:[%s3] sm:$0x1]
    %v87 = vlaneseq
    %v88 = vshrl.u32 %v87, 7
    %v89 = vsub.s32 0, %v88
    %v90 = vrot.slane %v85, %v89
    %vm92 = vcmask 130048
    %v94 = vsel %vm92, %v81, 0
    %v97 = vsel %vm92, %v82, 0
    %99 = vmatprep.subr.mxu0 0.0
    %100 = vmatpush1.msra.mxu0 0.0
    %101 = vmatprep.subr.mxu0 0.0
    %102 = vmatpush1.msra.mxu0 0.0
    %103 = vmatprep.subr.mxu0 0.0
    %104 = vmatpush1.msra.mxu0 0.0
    %105 = vmatprep.subr.mxu0 0.0
    %106 = vmatpush1.msra.mxu0 0.0
    %107 = vmatprep.subr.mxu0 0.0
    %108 = vmatpush1.msra.mxu0 0.0
    %109 = vmatprep.subr.mxu0 0.0
    %110 = vmatpush1.msra.mxu0 0.0
    %111 = vmatprep.subr.mxu0 0.0
    %112 = vmatpush1.msra.mxu0 0.0
    %113 = vmatprep.subr.mxu0 0.0
    %114 = vmatpush1.msra.mxu0 0.0
    %115 = vmatprep.subr.mxu0 0.0
    %116 = vmatpush1.msra.mxu0 0.0
    %117 = vmatprep.subr.mxu0 0.0
    %118 = vmatpush1.msra.mxu0 0.0
    %119 = vmatprep.subr.mxu0 0.0
    %120 = vmatpush1.msra.mxu0 0.0
    %121 = vmatprep.subr.mxu0 0.0
    %122 = vmatpush1.msra.mxu0 0.0
    %123 = vmatprep.subr.mxu0 0.0
    %124 = vmatpush1.msra.mxu0 0.0
    %125 = vmatprep.subr.mxu0 0.0
    %126 = vmatpush1.msra.mxu0 0.0
    %127 = vmatprep.subr.mxu0 0.0
    %128 = vmatpush1.msra.mxu0 %v84
    %129 = vmatprep.subr.mxu0 0.0
    %130 = vmatpush1.msra.mxu0 %v83
    %131 = vmatprep.subr.mxu0 0.0
    %132 = vmatpush2.msra.mxu0 0.0
    %133 = vmatprep.subr.mxu0 0.0
    %134 = vmatpush2.msra.mxu0 0.0
    %135 = vmatprep.subr.mxu0 0.0
    %136 = vmatpush2.msra.mxu0 0.0
    %137 = vmatprep.subr.mxu0 0.0
    %138 = vmatpush2.msra.mxu0 0.0
    %139 = vmatprep.subr.mxu0 0.0
    %140 = vmatpush2.msra.mxu0 0.0
    %141 = vmatprep.subr.mxu0 0.0
    %142 = vmatpush2.msra.mxu0 0.0
    %143 = vmatprep.subr.mxu0 0.0
    %144 = vmatpush2.msra.mxu0 0.0
    %145 = vmatprep.subr.mxu0 0.0
    %146 = vmatpush2.msra.mxu0 0.0
    %147 = vmatprep.subr.mxu0 0.0
    %148 = vmatpush2.msra.mxu0 0.0
    %149 = vmatprep.subr.mxu0 0.0
    %150 = vmatpush2.msra.mxu0 0.0
    %151 = vmatprep.subr.mxu0 0.0
    %152 = vmatpush2.msra.mxu0 0.0
    %153 = vmatprep.subr.mxu0 0.0
    %154 = vmatpush2.msra.mxu0 0.0
    %155 = vmatprep.subr.mxu0 0.0
    %156 = vmatpush2.msra.mxu0 0.0
    %157 = vmatprep.subr.mxu0 0.0
    %158 = vmatpush2.msra.mxu0 0.0
    %159 = vmatprep.subr.mxu0 0.0
    %160 = vmatpush2.msra.mxu0 0.0
    %161 = vmatprep.subr.mxu0 0.0
    %162 = vmatpush2.msra.mxu0 0.0
    %163 = vmatprep.mubr.f32.mxu0 0.0
    %164 = vmatmul.mubr.f32.gmra.mxu0 %v94
    %v165 = vpop.f32.mrf.mxu0
    %v166 = vadd.f32 %v90, %v165
    %v167 = vpop.f32.mrf.mxu0
    %168 = vmatprep.mubr.f32.mxu0 0.0
    %169 = vmatmul.mubr.f32.gmra.mxu0 %v97
    %v170 = vpop.f32.mrf.mxu0
    %v171 = vadd.f32 %v90, %v170
    %v172 = vpop.f32.mrf.mxu0
    %173 = vdwg.mxu0
    %vm174 = vcmask 785408
    %175 = vst.msk [vmem:[#allocation2] sm:$0xff] %vm174, %v166
    %176 = vst.msk [vmem:[#allocation2 + $0x8] sm:$0xff] %vm174, %v171
    %v177 = vld [vmem:[#allocation8] sm:$0xff]
    %v178 = vld [vmem:[#allocation8 + $0x8] sm:$0xff]
    %v179 = vld [vmem:[#allocation8 + $0x10] sm:$0xff]
    %v180 = vld [vmem:[#allocation8 + $0x18] sm:$0xff]
    %v181 = vld [vmem:[%s4] sm:$0x1]
    %v183 = vlaneseq
    %v184 = vshrl.u32 %v183, 7
    %v185 = vsub.s32 0, %v184
    %v186 = vrot.slane %v181, %v185
    %v187 = vld [vmem:[#allocation2] ss:$8 sm:$0x3]
    %vm188 = vcmask 261120
    %v190 = vsel %vm188, 0.0, 0
    %192 = vmatprep.subr.mxu0 0.0
    %193 = vmatpush1.msra.mxu0 0.0
    %194 = vmatprep.subr.mxu0 0.0
    %195 = vmatpush1.msra.mxu0 0.0
    %196 = vmatprep.subr.mxu0 0.0
    %197 = vmatpush1.msra.mxu0 0.0
    %198 = vmatprep.subr.mxu0 0.0
    %199 = vmatpush1.msra.mxu0 0.0
    %200 = vmatprep.subr.mxu0 0.0
    %201 = vmatpush1.msra.mxu0 0.0
    %202 = vmatprep.subr.mxu0 0.0
    %203 = vmatpush1.msra.mxu0 0.0
    %204 = vmatprep.subr.mxu0 0.0
    %205 = vmatpush1.msra.mxu0 0.0
    %206 = vmatprep.subr.mxu0 0.0
    %207 = vmatpush1.msra.mxu0 0.0
    %208 = vmatprep.subr.mxu0 0.0
    %209 = vmatpush1.msra.mxu0 0.0
    %210 = vmatprep.subr.mxu0 0.0
    %211 = vmatpush1.msra.mxu0 0.0
    %212 = vmatprep.subr.mxu0 0.0
    %213 = vmatpush1.msra.mxu0 0.0
    %214 = vmatprep.subr.mxu0 0.0
    %215 = vmatpush1.msra.mxu0 0.0
    %216 = vmatprep.subr.mxu0 0.0
    %217 = vmatpush1.msra.mxu0 %v180
    %218 = vmatprep.subr.mxu0 0.0
    %219 = vmatpush1.msra.mxu0 %v179
    %220 = vmatprep.subr.mxu0 0.0
    %221 = vmatpush1.msra.mxu0 %v178
    %222 = vmatprep.subr.mxu0 0.0
    %223 = vmatpush1.msra.mxu0 %v177
    %224 = vmatprep.subr.mxu0 0.0
    %225 = vmatpush2.msra.mxu0 0.0
    %226 = vmatprep.subr.mxu0 0.0
    %227 = vmatpush2.msra.mxu0 0.0
    %228 = vmatprep.subr.mxu0 0.0
    %229 = vmatpush2.msra.mxu0 0.0
    %230 = vmatprep.subr.mxu0 0.0
    %231 = vmatpush2.msra.mxu0 0.0
    %232 = vmatprep.subr.mxu0 0.0
    %233 = vmatpush2.msra.mxu0 0.0
    %234 = vmatprep.subr.mxu0 0.0
    %235 = vmatpush2.msra.mxu0 0.0
    %236 = vmatprep.subr.mxu0 0.0
    %237 = vmatpush2.msra.mxu0 0.0
    %238 = vmatprep.subr.mxu0 0.0
    %239 = vmatpush2.msra.mxu0 0.0
    %240 = vmatprep.subr.mxu0 0.0
    %241 = vmatpush2.msra.mxu0 0.0
    %242 = vmatprep.subr.mxu0 0.0
    %243 = vmatpush2.msra.mxu0 0.0
    %244 = vmatprep.subr.mxu0 0.0
    %245 = vmatpush2.msra.mxu0 0.0
    %246 = vmatprep.subr.mxu0 0.0
    %247 = vmatpush2.msra.mxu0 0.0
    %248 = vmatprep.subr.mxu0 0.0
    %249 = vmatpush2.msra.mxu0 0.0
    %250 = vmatprep.subr.mxu0 0.0
    %251 = vmatpush2.msra.mxu0 0.0
    %252 = vmatprep.subr.mxu0 0.0
    %253 = vmatpush2.msra.mxu0 0.0
    %254 = vmatprep.subr.mxu0 0.0
    %255 = vmatpush2.msra.mxu0 0.0
    %256 = vmatprep.mubr.f32.mxu0 0.0
    %257 = vmatmul.mubr.f32.gmra.mxu0 %v190
    %v258 = vpop.f32.mrf.mxu0
    %v259 = vadd.f32 0.0, %v258
    %v260 = vpop.f32.mrf.mxu0
    %261 = vdwg.mxu0
    %v262 = vadd.f32 %v187, %v259
    %v263 = vxor.u32 %v262, 2147483648
    %v264 = vmul.f32 %v263, 1.442695
    %v265 = vpow.pop %v264
    %v266 = vadd.f32 %v265, 1.0
    %v267 = vrcp.pop %v266
    %v268 = vmul.f32 1.0, %v267
    %269 = vrot.lane.b32.xlu0 %v186, 64
    %v270 = vpop.permute.xlu0 %269
    %v272 = vadd.f32 %v259, %v270
    %274 = vrot.lane.b32.xlu0 %v272, 64
    %v275 = vpop.permute.xlu0 %274
    %v277 = vmul.f32 %v268, %v275
    %279 = vrot.lane.b32.xlu0 %v277, 64
    %v280 = vpop.permute.xlu0 %279
    %v282 = vadd.f32 %v187, %v280
    %v283 = vtanh.pop %v282
    %v284 = vsub.f32 1.0, %v268
    %286 = vrot.lane.b32.xlu0 %v283, 96
    %v287 = vpop.permute.xlu0 %286
    %v289 = vmul.f32 %v284, %v287
    %v290 = vmul.f32 %v268, 0.0
    %v291 = vadd.f32 %v289, %v290
    %293 = vrot.lane.b32.xlu0 %v291, 96
    %v294 = vpop.permute.xlu0 %293
    %vm296 = vcmask 253952
    %297 = vst.msk [vmem:[#allocation3] sm:$0x1] %vm296, %v294
    %vm298 = vcmask 254977
    %299 = vst.msk [vmem:[#allocation3 + $0x7] sm:$0x2] %vm298, %v294
    %s300 = scalar_lea.vmem [#allocation2], 1
    %v301 = vld [vmem:[%s300] ss:$8 sm:$0x3]
    %v302 = vsel %vm188, %v294, 0
    %304 = vmatprep.subr.mxu0 0.0
    %305 = vmatpush1.msra.mxu0 0.0
    %306 = vmatprep.subr.mxu0 0.0
    %307 = vmatpush1.msra.mxu0 0.0
    %308 = vmatprep.subr.mxu0 0.0
    %309 = vmatpush1.msra.mxu0 0.0
    %310 = vmatprep.subr.mxu0 0.0
    %311 = vmatpush1.msra.mxu0 0.0
    %312 = vmatprep.subr.mxu0 0.0
    %313 = vmatpush1.msra.mxu0 0.0
    %314 = vmatprep.subr.mxu0 0.0
    %315 = vmatpush1.msra.mxu0 0.0
    %316 = vmatprep.subr.mxu0 0.0
    %317 = vmatpush1.msra.mxu0 0.0
    %318 = vmatprep.subr.mxu0 0.0
    %319 = vmatpush1.msra.mxu0 0.0
    %320 = vmatprep.subr.mxu0 0.0
    %321 = vmatpush1.msra.mxu0 0.0
    %322 = vmatprep.subr.mxu0 0.0
    %323 = vmatpush1.msra.mxu0 0.0
    %324 = vmatprep.subr.mxu0 0.0
    %325 = vmatpush1.msra.mxu0 0.0
    %326 = vmatprep.subr.mxu0 0.0
    %327 = vmatpush1.msra.mxu0 0.0
    %328 = vmatprep.subr.mxu0 0.0
    %329 = vmatpush1.msra.mxu0 %v180
    %330 = vmatprep.subr.mxu0 0.0
    %331 = vmatpush1.msra.mxu0 %v179
    %332 = vmatprep.subr.mxu0 0.0
    %333 = vmatpush1.msra.mxu0 %v178
    %334 = vmatprep.subr.mxu0 0.0
    %335 = vmatpush1.msra.mxu0 %v177
    %336 = vmatprep.subr.mxu0 0.0
    %337 = vmatpush2.msra.mxu0 0.0
    %338 = vmatprep.subr.mxu0 0.0
    %339 = vmatpush2.msra.mxu0 0.0
    %340 = vmatprep.subr.mxu0 0.0
    %341 = vmatpush2.msra.mxu0 0.0
    %342 = vmatprep.subr.mxu0 0.0
    %343 = vmatpush2.msra.mxu0 0.0
    %344 = vmatprep.subr.mxu0 0.0
    %345 = vmatpush2.msra.mxu0 0.0
    %346 = vmatprep.subr.mxu0 0.0
    %347 = vmatpush2.msra.mxu0 0.0
    %348 = vmatprep.subr.mxu0 0.0
    %349 = vmatpush2.msra.mxu0 0.0
    %350 = vmatprep.subr.mxu0 0.0
    %351 = vmatpush2.msra.mxu0 0.0
    %352 = vmatprep.subr.mxu0 0.0
    %353 = vmatpush2.msra.mxu0 0.0
    %354 = vmatprep.subr.mxu0 0.0
    %355 = vmatpush2.msra.mxu0 0.0
    %356 = vmatprep.subr.mxu0 0.0
    %357 = vmatpush2.msra.mxu0 0.0
    %358 = vmatprep.subr.mxu0 0.0
    %359 = vmatpush2.msra.mxu0 0.0
    %360 = vmatprep.subr.mxu0 0.0
    %361 = vmatpush2.msra.mxu0 0.0
    %362 = vmatprep.subr.mxu0 0.0
    %363 = vmatpush2.msra.mxu0 0.0
    %364 = vmatprep.subr.mxu0 0.0
    %365 = vmatpush2.msra.mxu0 0.0
    %366 = vmatprep.subr.mxu0 0.0
    %367 = vmatpush2.msra.mxu0 0.0
    %368 = vmatprep.mubr.f32.mxu0 0.0
    %369 = vmatmul.mubr.f32.gmra.mxu0 %v302
    %v370 = vpop.f32.mrf.mxu0
    %v371 = vadd.f32 0.0, %v370
    %v372 = vpop.f32.mrf.mxu0
    %373 = vdwg.mxu0
    %v374 = vadd.f32 %v301, %v371
    %v375 = vxor.u32 %v374, 2147483648
    %v376 = vmul.f32 %v375, 1.442695
    %v377 = vpow.pop %v376
    %v378 = vadd.f32 %v377, 1.0
    %v379 = vrcp.pop %v378
    %v380 = vmul.f32 1.0, %v379
    %v381 = vadd.f32 %v371, %v270
    %383 = vrot.lane.b32.xlu0 %v381, 64
    %v384 = vpop.permute.xlu0 %383
    %v386 = vmul.f32 %v380, %v384
    %388 = vrot.lane.b32.xlu0 %v386, 64
    %v389 = vpop.permute.xlu0 %388
    %v391 = vadd.f32 %v301, %v389
    %v392 = vtanh.pop %v391
    %v393 = vsub.f32 1.0, %v380
    %395 = vrot.lane.b32.xlu0 %v392, 96
    %v396 = vpop.permute.xlu0 %395
    %v398 = vmul.f32 %v393, %v396
    %v399 = vmul.f32 %v380, %v291
    %v400 = vadd.f32 %v398, %v399
    %402 = vrot.lane.b32.xlu0 %v400, 96
    %v403 = vpop.permute.xlu0 %402
    %405 = vst.msk [vmem:[#allocation3 + $0x1] sm:$0x1] %vm296, %v403
    %406 = vst.msk [vmem:[#allocation3 + $0x8] sm:$0x2] %vm298, %v403
    %s407 = scalar_lea.vmem [#allocation2], 2
    %v408 = vld [vmem:[%s407] ss:$8 sm:$0x3]
    %v409 = vsel %vm188, %v403, 0
    %411 = vmatprep.subr.mxu0 0.0
    %412 = vmatpush1.msra.mxu0 0.0
    %413 = vmatprep.subr.mxu0 0.0
    %414 = vmatpush1.msra.mxu0 0.0
    %415 = vmatprep.subr.mxu0 0.0
    %416 = vmatpush1.msra.mxu0 0.0
    %417 = vmatprep.subr.mxu0 0.0
    %418 = vmatpush1.msra.mxu0 0.0
    %419 = vmatprep.subr.mxu0 0.0
    %420 = vmatpush1.msra.mxu0 0.0
    %421 = vmatprep.subr.mxu0 0.0
    %422 = vmatpush1.msra.mxu0 0.0
    %423 = vmatprep.subr.mxu0 0.0
    %424 = vmatpush1.msra.mxu0 0.0
    %425 = vmatprep.subr.mxu0 0.0
    %426 = vmatpush1.msra.mxu0 0.0
    %427 = vmatprep.subr.mxu0 0.0
    %428 = vmatpush1.msra.mxu0 0.0
    %429 = vmatprep.subr.mxu0 0.0
    %430 = vmatpush1.msra.mxu0 0.0
    %431 = vmatprep.subr.mxu0 0.0
    %432 = vmatpush1.msra.mxu0 0.0
    %433 = vmatprep.subr.mxu0 0.0
    %434 = vmatpush1.msra.mxu0 0.0
    %435 = vmatprep.subr.mxu0 0.0
    %436 = vmatpush1.msra.mxu0 %v180
    %437 = vmatprep.subr.mxu0 0.0
    %438 = vmatpush1.msra.mxu0 %v179
    %439 = vmatprep.subr.mxu0 0.0
    %440 = vmatpush1.msra.mxu0 %v178
    %441 = vmatprep.subr.mxu0 0.0
    %442 = vmatpush1.msra.mxu0 %v177
    %443 = vmatprep.subr.mxu0 0.0
    %444 = vmatpush2.msra.mxu0 0.0
    %445 = vmatprep.subr.mxu0 0.0
    %446 = vmatpush2.msra.mxu0 0.0
    %447 = vmatprep.subr.mxu0 0.0
    %448 = vmatpush2.msra.mxu0 0.0
    %449 = vmatprep.subr.mxu0 0.0
    %450 = vmatpush2.msra.mxu0 0.0
    %451 = vmatprep.subr.mxu0 0.0
    %452 = vmatpush2.msra.mxu0 0.0
    %453 = vmatprep.subr.mxu0 0.0
    %454 = vmatpush2.msra.mxu0 0.0
    %455 = vmatprep.subr.mxu0 0.0
    %456 = vmatpush2.msra.mxu0 0.0
    %457 = vmatprep.subr.mxu0 0.0
    %458 = vmatpush2.msra.mxu0 0.0
    %459 = vmatprep.subr.mxu0 0.0
    %460 = vmatpush2.msra.mxu0 0.0
    %461 = vmatprep.subr.mxu0 0.0
    %462 = vmatpush2.msra.mxu0 0.0
    %463 = vmatprep.subr.mxu0 0.0
    %464 = vmatpush2.msra.mxu0 0.0
    %465 = vmatprep.subr.mxu0 0.0
    %466 = vmatpush2.msra.mxu0 0.0
    %467 = vmatprep.subr.mxu0 0.0
    %468 = vmatpush2.msra.mxu0 0.0
    %469 = vmatprep.subr.mxu0 0.0
    %470 = vmatpush2.msra.mxu0 0.0
    %471 = vmatprep.subr.mxu0 0.0
    %472 = vmatpush2.msra.mxu0 0.0
    %473 = vmatprep.subr.mxu0 0.0
    %474 = vmatpush2.msra.mxu0 0.0
    %475 = vmatprep.mubr.f32.mxu0 0.0
    %476 = vmatmul.mubr.f32.gmra.mxu0 %v409
    %v477 = vpop.f32.mrf.mxu0
    %v478 = vadd.f32 0.0, %v477
    %v479 = vpop.f32.mrf.mxu0
    %480 = vdwg.mxu0
    %v481 = vadd.f32 %v408, %v478
    %v482 = vxor.u32 %v481, 2147483648
    %v483 = vmul.f32 %v482, 1.442695
    %v484 = vpow.pop %v483
    %v485 = vadd.f32 %v484, 1.0
    %v486 = vrcp.pop %v485
    %v487 = vmul.f32 1.0, %v486
    %v488 = vadd.f32 %v478, %v270
    %490 = vrot.lane.b32.xlu0 %v488, 64
    %v491 = vpop.permute.xlu0 %490
    %v493 = vmul.f32 %v487, %v491
    %495 = vrot.lane.b32.xlu0 %v493, 64
    %v496 = vpop.permute.xlu0 %495
    %v498 = vadd.f32 %v408, %v496
    %v499 = vtanh.pop %v498
    %v500 = vsub.f32 1.0, %v487
    %502 = vrot.lane.b32.xlu0 %v499, 96
    %v503 = vpop.permute.xlu0 %502
    %v505 = vmul.f32 %v500, %v503
    %v506 = vmul.f32 %v487, %v400
    %v507 = vadd.f32 %v505, %v506
    %509 = vrot.lane.b32.xlu0 %v507, 96
    %v510 = vpop.permute.xlu0 %509
    %512 = vst.msk [vmem:[#allocation3 + $0x2] sm:$0x1] %vm296, %v510
    %513 = vst.msk [vmem:[#allocation3 + $0x9] sm:$0x2] %vm298, %v510
    %s514 = scalar_lea.vmem [#allocation2], 3
    %v515 = vld [vmem:[%s514] ss:$8 sm:$0x3]
    %v516 = vsel %vm188, %v510, 0
    %518 = vmatprep.subr.mxu0 0.0
    %519 = vmatpush1.msra.mxu0 0.0
    %520 = vmatprep.subr.mxu0 0.0
    %521 = vmatpush1.msra.mxu0 0.0
    %522 = vmatprep.subr.mxu0 0.0
    %523 = vmatpush1.msra.mxu0 0.0
    %524 = vmatprep.subr.mxu0 0.0
    %525 = vmatpush1.msra.mxu0 0.0
    %526 = vmatprep.subr.mxu0 0.0
    %527 = vmatpush1.msra.mxu0 0.0
    %528 = vmatprep.subr.mxu0 0.0
    %529 = vmatpush1.msra.mxu0 0.0
    %530 = vmatprep.subr.mxu0 0.0
    %531 = vmatpush1.msra.mxu0 0.0
    %532 = vmatprep.subr.mxu0 0.0
    %533 = vmatpush1.msra.mxu0 0.0
    %534 = vmatprep.subr.mxu0 0.0
    %535 = vmatpush1.msra.mxu0 0.0
    %536 = vmatprep.subr.mxu0 0.0
    %537 = vmatpush1.msra.mxu0 0.0
    %538 = vmatprep.subr.mxu0 0.0
    %539 = vmatpush1.msra.mxu0 0.0
    %540 = vmatprep.subr.mxu0 0.0
    %541 = vmatpush1.msra.mxu0 0.0
    %542 = vmatprep.subr.mxu0 0.0
    %543 = vmatpush1.msra.mxu0 %v180
    %544 = vmatprep.subr.mxu0 0.0
    %545 = vmatpush1.msra.mxu0 %v179
    %546 = vmatprep.subr.mxu0 0.0
    %547 = vmatpush1.msra.mxu0 %v178
    %548 = vmatprep.subr.mxu0 0.0
    %549 = vmatpush1.msra.mxu0 %v177
    %550 = vmatprep.subr.mxu0 0.0
    %551 = vmatpush2.msra.mxu0 0.0
    %552 = vmatprep.subr.mxu0 0.0
    %553 = vmatpush2.msra.mxu0 0.0
    %554 = vmatprep.subr.mxu0 0.0
    %555 = vmatpush2.msra.mxu0 0.0
    %556 = vmatprep.subr.mxu0 0.0
    %557 = vmatpush2.msra.mxu0 0.0
    %558 = vmatprep.subr.mxu0 0.0
    %559 = vmatpush2.msra.mxu0 0.0
    %560 = vmatprep.subr.mxu0 0.0
    %561 = vmatpush2.msra.mxu0 0.0
    %562 = vmatprep.subr.mxu0 0.0
    %563 = vmatpush2.msra.mxu0 0.0
    %564 = vmatprep.subr.mxu0 0.0
    %565 = vmatpush2.msra.mxu0 0.0
    %566 = vmatprep.subr.mxu0 0.0
    %567 = vmatpush2.msra.mxu0 0.0
    %568 = vmatprep.subr.mxu0 0.0
    %569 = vmatpush2.msra.mxu0 0.0
    %570 = vmatprep.subr.mxu0 0.0
    %571 = vmatpush2.msra.mxu0 0.0
    %572 = vmatprep.subr.mxu0 0.0
    %573 = vmatpush2.msra.mxu0 0.0
    %574 = vmatprep.subr.mxu0 0.0
    %575 = vmatpush2.msra.mxu0 0.0
    %576 = vmatprep.subr.mxu0 0.0
    %577 = vmatpush2.msra.mxu0 0.0
    %578 = vmatprep.subr.mxu0 0.0
    %579 = vmatpush2.msra.mxu0 0.0
    %580 = vmatprep.subr.mxu0 0.0
    %581 = vmatpush2.msra.mxu0 0.0
    %582 = vmatprep.mubr.f32.mxu0 0.0
    %583 = vmatmul.mubr.f32.gmra.mxu0 %v516
    %v584 = vpop.f32.mrf.mxu0
    %v585 = vadd.f32 0.0, %v584
    %v586 = vpop.f32.mrf.mxu0
    %587 = vdwg.mxu0
    %v588 = vadd.f32 %v515, %v585
    %v589 = vxor.u32 %v588, 2147483648
    %v590 = vmul.f32 %v589, 1.442695
    %v591 = vpow.pop %v590
    %v592 = vadd.f32 %v591, 1.0
    %v593 = vrcp.pop %v592
    %v594 = vmul.f32 1.0, %v593
    %v595 = vadd.f32 %v585, %v270
    %597 = vrot.lane.b32.xlu0 %v595, 64
    %v598 = vpop.permute.xlu0 %597
    %v600 = vmul.f32 %v594, %v598
    %602 = vrot.lane.b32.xlu0 %v600, 64
    %v603 = vpop.permute.xlu0 %602
    %v605 = vadd.f32 %v515, %v603
    %v606 = vtanh.pop %v605
    %v607 = vsub.f32 1.0, %v594
    %609 = vrot.lane.b32.xlu0 %v606, 96
    %v610 = vpop.permute.xlu0 %609
    %v612 = vmul.f32 %v607, %v610
    %v613 = vmul.f32 %v594, %v507
    %v614 = vadd.f32 %v612, %v613
    %616 = vrot.lane.b32.xlu0 %v614, 96
    %v617 = vpop.permute.xlu0 %616
    %619 = vst.msk [vmem:[#allocation3 + $0x3] sm:$0x1] %vm296, %v617
    %620 = vst.msk [vmem:[#allocation3 + $0xa] sm:$0x2] %vm298, %v617
    %s621 = scalar_lea.vmem [#allocation2], 4
    %v622 = vld [vmem:[%s621] ss:$8 sm:$0x3]
    %v623 = vsel %vm188, %v617, 0
    %625 = vmatprep.subr.mxu0 0.0
    %626 = vmatpush1.msra.mxu0 0.0
    %627 = vmatprep.subr.mxu0 0.0
    %628 = vmatpush1.msra.mxu0 0.0
    %629 = vmatprep.subr.mxu0 0.0
    %630 = vmatpush1.msra.mxu0 0.0
    %631 = vmatprep.subr.mxu0 0.0
    %632 = vmatpush1.msra.mxu0 0.0
    %633 = vmatprep.subr.mxu0 0.0
    %634 = vmatpush1.msra.mxu0 0.0
    %635 = vmatprep.subr.mxu0 0.0
    %636 = vmatpush1.msra.mxu0 0.0
    %637 = vmatprep.subr.mxu0 0.0
    %638 = vmatpush1.msra.mxu0 0.0
    %639 = vmatprep.subr.mxu0 0.0
    %640 = vmatpush1.msra.mxu0 0.0
    %641 = vmatprep.subr.mxu0 0.0
    %642 = vmatpush1.msra.mxu0 0.0
    %643 = vmatprep.subr.mxu0 0.0
    %644 = vmatpush1.msra.mxu0 0.0
    %645 = vmatprep.subr.mxu0 0.0
    %646 = vmatpush1.msra.mxu0 0.0
    %647 = vmatprep.subr.mxu0 0.0
    %648 = vmatpush1.msra.mxu0 0.0
    %649 = vmatprep.subr.mxu0 0.0
    %650 = vmatpush1.msra.mxu0 %v180
    %651 = vmatprep.subr.mxu0 0.0
    %652 = vmatpush1.msra.mxu0 %v179
    %653 = vmatprep.subr.mxu0 0.0
    %654 = vmatpush1.msra.mxu0 %v178
    %655 = vmatprep.subr.mxu0 0.0
    %656 = vmatpush1.msra.mxu0 %v177
    %657 = vmatprep.subr.mxu0 0.0
    %658 = vmatpush2.msra.mxu0 0.0
    %659 = vmatprep.subr.mxu0 0.0
    %660 = vmatpush2.msra.mxu0 0.0
    %661 = vmatprep.subr.mxu0 0.0
    %662 = vmatpush2.msra.mxu0 0.0
    %663 = vmatprep.subr.mxu0 0.0
    %664 = vmatpush2.msra.mxu0 0.0
    %665 = vmatprep.subr.mxu0 0.0
    %666 = vmatpush2.msra.mxu0 0.0
    %667 = vmatprep.subr.mxu0 0.0
    %668 = vmatpush2.msra.mxu0 0.0
    %669 = vmatprep.subr.mxu0 0.0
    %670 = vmatpush2.msra.mxu0 0.0
    %671 = vmatprep.subr.mxu0 0.0
    %672 = vmatpush2.msra.mxu0 0.0
    %673 = vmatprep.subr.mxu0 0.0
    %674 = vmatpush2.msra.mxu0 0.0
    %675 = vmatprep.subr.mxu0 0.0
    %676 = vmatpush2.msra.mxu0 0.0
    %677 = vmatprep.subr.mxu0 0.0
    %678 = vmatpush2.msra.mxu0 0.0
    %679 = vmatprep.subr.mxu0 0.0
    %680 = vmatpush2.msra.mxu0 0.0
    %681 = vmatprep.subr.mxu0 0.0
    %682 = vmatpush2.msra.mxu0 0.0
    %683 = vmatprep.subr.mxu0 0.0
    %684 = vmatpush2.msra.mxu0 0.0
    %685 = vmatprep.subr.mxu0 0.0
    %686 = vmatpush2.msra.mxu0 0.0
    %687 = vmatprep.subr.mxu0 0.0
    %688 = vmatpush2.msra.mxu0 0.0
    %689 = vmatprep.mubr.f32.mxu0 0.0
    %690 = vmatmul.mubr.f32.gmra.mxu0 %v623
    %v691 = vpop.f32.mrf.mxu0
    %v692 = vadd.f32 0.0, %v691
    %v693 = vpop.f32.mrf.mxu0
    %694 = vdwg.mxu0
    %v695 = vadd.f32 %v622, %v692
    %v696 = vxor.u32 %v695, 2147483648
    %v697 = vmul.f32 %v696, 1.442695
    %v698 = vpow.pop %v697
    %v699 = vadd.f32 %v698, 1.0
    %v700 = vrcp.pop %v699
    %v701 = vmul.f32 1.0, %v700
    %v702 = vadd.f32 %v692, %v270
    %704 = vrot.lane.b32.xlu0 %v702, 64
    %v705 = vpop.permute.xlu0 %704
    %v707 = vmul.f32 %v701, %v705
    %709 = vrot.lane.b32.xlu0 %v707, 64
    %v710 = vpop.permute.xlu0 %709
    %v712 = vadd.f32 %v622, %v710
    %v713 = vtanh.pop %v712
    %v714 = vsub.f32 1.0, %v701
    %716 = vrot.lane.b32.xlu0 %v713, 96
    %v717 = vpop.permute.xlu0 %716
    %v719 = vmul.f32 %v714, %v717
    %v720 = vmul.f32 %v701, %v614
    %v721 = vadd.f32 %v719, %v720
    %723 = vrot.lane.b32.xlu0 %v721, 96
    %v724 = vpop.permute.xlu0 %723
    %726 = vst.msk [vmem:[#allocation3 + $0x4] sm:$0x1] %vm296, %v724
    %727 = vst.msk [vmem:[#allocation3 + $0xb] sm:$0x2] %vm298, %v724
    %s728 = scalar_lea.vmem [#allocation2], 5
    %v729 = vld [vmem:[%s728] ss:$8 sm:$0x3]
    %v730 = vsel %vm188, %v724, 0
    %732 = vmatprep.subr.mxu0 0.0
    %733 = vmatpush1.msra.mxu0 0.0
    %734 = vmatprep.subr.mxu0 0.0
    %735 = vmatpush1.msra.mxu0 0.0
    %736 = vmatprep.subr.mxu0 0.0
    %737 = vmatpush1.msra.mxu0 0.0
    %738 = vmatprep.subr.mxu0 0.0
    %739 = vmatpush1.msra.mxu0 0.0
    %740 = vmatprep.subr.mxu0 0.0
    %741 = vmatpush1.msra.mxu0 0.0
    %742 = vmatprep.subr.mxu0 0.0
    %743 = vmatpush1.msra.mxu0 0.0
    %744 = vmatprep.subr.mxu0 0.0
    %745 = vmatpush1.msra.mxu0 0.0
    %746 = vmatprep.subr.mxu0 0.0
    %747 = vmatpush1.msra.mxu0 0.0
    %748 = vmatprep.subr.mxu0 0.0
    %749 = vmatpush1.msra.mxu0 0.0
    %750 = vmatprep.subr.mxu0 0.0
    %751 = vmatpush1.msra.mxu0 0.0
    %752 = vmatprep.subr.mxu0 0.0
    %753 = vmatpush1.msra.mxu0 0.0
    %754 = vmatprep.subr.mxu0 0.0
    %755 = vmatpush1.msra.mxu0 0.0
    %756 = vmatprep.subr.mxu0 0.0
    %757 = vmatpush1.msra.mxu0 %v180
    %758 = vmatprep.subr.mxu0 0.0
    %759 = vmatpush1.msra.mxu0 %v179
    %760 = vmatprep.subr.mxu0 0.0
    %761 = vmatpush1.msra.mxu0 %v178
    %762 = vmatprep.subr.mxu0 0.0
    %763 = vmatpush1.msra.mxu0 %v177
    %764 = vmatprep.subr.mxu0 0.0
    %765 = vmatpush2.msra.mxu0 0.0
    %766 = vmatprep.subr.mxu0 0.0
    %767 = vmatpush2.msra.mxu0 0.0
    %768 = vmatprep.subr.mxu0 0.0
    %769 = vmatpush2.msra.mxu0 0.0
    %770 = vmatprep.subr.mxu0 0.0
    %771 = vmatpush2.msra.mxu0 0.0
    %772 = vmatprep.subr.mxu0 0.0
    %773 = vmatpush2.msra.mxu0 0.0
    %774 = vmatprep.subr.mxu0 0.0
    %775 = vmatpush2.msra.mxu0 0.0
    %776 = vmatprep.subr.mxu0 0.0
    %777 = vmatpush2.msra.mxu0 0.0
    %778 = vmatprep.subr.mxu0 0.0
    %779 = vmatpush2.msra.mxu0 0.0
    %780 = vmatprep.subr.mxu0 0.0
    %781 = vmatpush2.msra.mxu0 0.0
    %782 = vmatprep.subr.mxu0 0.0
    %783 = vmatpush2.msra.mxu0 0.0
    %784 = vmatprep.subr.mxu0 0.0
    %785 = vmatpush2.msra.mxu0 0.0
    %786 = vmatprep.subr.mxu0 0.0
    %787 = vmatpush2.msra.mxu0 0.0
    %788 = vmatprep.subr.mxu0 0.0
    %789 = vmatpush2.msra.mxu0 0.0
    %790 = vmatprep.subr.mxu0 0.0
    %791 = vmatpush2.msra.mxu0 0.0
    %792 = vmatprep.subr.mxu0 0.0
    %793 = vmatpush2.msra.mxu0 0.0
    %794 = vmatprep.subr.mxu0 0.0
    %795 = vmatpush2.msra.mxu0 0.0
    %796 = vmatprep.mubr.f32.mxu0 0.0
    %797 = vmatmul.mubr.f32.gmra.mxu0 %v730
    %v798 = vpop.f32.mrf.mxu0
    %v799 = vadd.f32 0.0, %v798
    %v800 = vpop.f32.mrf.mxu0
    %801 = vdwg.mxu0
    %v802 = vadd.f32 %v729, %v799
    %v803 = vxor.u32 %v802, 2147483648
    %v804 = vmul.f32 %v803, 1.442695
    %v805 = vpow.pop %v804
    %v806 = vadd.f32 %v805, 1.0
    %v807 = vrcp.pop %v806
    %v808 = vmul.f32 1.0, %v807
    %v809 = vadd.f32 %v799, %v270
    %811 = vrot.lane.b32.xlu0 %v809, 64
    %v812 = vpop.permute.xlu0 %811
    %v814 = vmul.f32 %v808, %v812
    %816 = vrot.lane.b32.xlu0 %v814, 64
    %v817 = vpop.permute.xlu0 %816
    %v819 = vadd.f32 %v729, %v817
    %v820 = vtanh.pop %v819
    %v821 = vsub.f32 1.0, %v808
    %823 = vrot.lane.b32.xlu0 %v820, 96
    %v824 = vpop.permute.xlu0 %823
    %v826 = vmul.f32 %v821, %v824
    %v827 = vmul.f32 %v808, %v721
    %v828 = vadd.f32 %v826, %v827
    %830 = vrot.lane.b32.xlu0 %v828, 96
    %v831 = vpop.permute.xlu0 %830
    %833 = vst.msk [vmem:[#allocation3 + $0x5] sm:$0x1] %vm296, %v831
    %834 = vst.msk [vmem:[#allocation3 + $0xc] sm:$0x2] %vm298, %v831
    %s835 = scalar_lea.vmem [#allocation2], 6
    %v836 = vld [vmem:[%s835] ss:$8 sm:$0x3]
    %v837 = vsel %vm188, %v831, 0
    %839 = vmatprep.subr.mxu0 0.0
    %840 = vmatpush1.msra.mxu0 0.0
    %841 = vmatprep.subr.mxu0 0.0
    %842 = vmatpush1.msra.mxu0 0.0
    %843 = vmatprep.subr.mxu0 0.0
    %844 = vmatpush1.msra.mxu0 0.0
    %845 = vmatprep.subr.mxu0 0.0
    %846 = vmatpush1.msra.mxu0 0.0
    %847 = vmatprep.subr.mxu0 0.0
    %848 = vmatpush1.msra.mxu0 0.0
    %849 = vmatprep.subr.mxu0 0.0
    %850 = vmatpush1.msra.mxu0 0.0
    %851 = vmatprep.subr.mxu0 0.0
    %852 = vmatpush1.msra.mxu0 0.0
    %853 = vmatprep.subr.mxu0 0.0
    %854 = vmatpush1.msra.mxu0 0.0
    %855 = vmatprep.subr.mxu0 0.0
    %856 = vmatpush1.msra.mxu0 0.0
    %857 = vmatprep.subr.mxu0 0.0
    %858 = vmatpush1.msra.mxu0 0.0
    %859 = vmatprep.subr.mxu0 0.0
    %860 = vmatpush1.msra.mxu0 0.0
    %861 = vmatprep.subr.mxu0 0.0
    %862 = vmatpush1.msra.mxu0 0.0
    %863 = vmatprep.subr.mxu0 0.0
    %864 = vmatpush1.msra.mxu0 %v180
    %865 = vmatprep.subr.mxu0 0.0
    %866 = vmatpush1.msra.mxu0 %v179
    %867 = vmatprep.subr.mxu0 0.0
    %868 = vmatpush1.msra.mxu0 %v178
    %869 = vmatprep.subr.mxu0 0.0
    %870 = vmatpush1.msra.mxu0 %v177
    %871 = vmatprep.subr.mxu0 0.0
    %872 = vmatpush2.msra.mxu0 0.0
    %873 = vmatprep.subr.mxu0 0.0
    %874 = vmatpush2.msra.mxu0 0.0
    %875 = vmatprep.subr.mxu0 0.0
    %876 = vmatpush2.msra.mxu0 0.0
    %877 = vmatprep.subr.mxu0 0.0
    %878 = vmatpush2.msra.mxu0 0.0
    %879 = vmatprep.subr.mxu0 0.0
    %880 = vmatpush2.msra.mxu0 0.0
    %881 = vmatprep.subr.mxu0 0.0
    %882 = vmatpush2.msra.mxu0 0.0
    %883 = vmatprep.subr.mxu0 0.0
    %884 = vmatpush2.msra.mxu0 0.0
    %885 = vmatprep.subr.mxu0 0.0
    %886 = vmatpush2.msra.mxu0 0.0
    %887 = vmatprep.subr.mxu0 0.0
    %888 = vmatpush2.msra.mxu0 0.0
    %889 = vmatprep.subr.mxu0 0.0
    %890 = vmatpush2.msra.mxu0 0.0
    %891 = vmatprep.subr.mxu0 0.0
    %892 = vmatpush2.msra.mxu0 0.0
    %893 = vmatprep.subr.mxu0 0.0
    %894 = vmatpush2.msra.mxu0 0.0
    %895 = vmatprep.subr.mxu0 0.0
    %896 = vmatpush2.msra.mxu0 0.0
    %897 = vmatprep.subr.mxu0 0.0
    %898 = vmatpush2.msra.mxu0 0.0
    %899 = vmatprep.subr.mxu0 0.0
    %900 = vmatpush2.msra.mxu0 0.0
    %901 = vmatprep.subr.mxu0 0.0
    %902 = vmatpush2.msra.mxu0 0.0
    %903 = vmatprep.mubr.f32.mxu0 0.0
    %904 = vmatmul.mubr.f32.gmra.mxu0 %v837
    %v905 = vpop.f32.mrf.mxu0
    %v906 = vadd.f32 0.0, %v905
    %v907 = vpop.f32.mrf.mxu0
    %908 = vdwg.mxu0
    %v909 = vadd.f32 %v836, %v906
    %v910 = vxor.u32 %v909, 2147483648
    %v911 = vmul.f32 %v910, 1.442695
    %v912 = vpow.pop %v911
    %v913 = vadd.f32 %v912, 1.0
    %v914 = vrcp.pop %v913
    %v915 = vmul.f32 1.0, %v914
    %v916 = vadd.f32 %v906, %v270
    %918 = vrot.lane.b32.xlu0 %v916, 64
    %v919 = vpop.permute.xlu0 %918
    %v921 = vmul.f32 %v915, %v919
    %923 = vrot.lane.b32.xlu0 %v921, 64
    %v924 = vpop.permute.xlu0 %923
    %v926 = vadd.f32 %v836, %v924
    %v927 = vtanh.pop %v926
    %v928 = vsub.f32 1.0, %v915
    %930 = vrot.lane.b32.xlu0 %v927, 96
    %v931 = vpop.permute.xlu0 %930
    %v933 = vmul.f32 %v928, %v931
    %v934 = vmul.f32 %v915, %v828
    %v935 = vadd.f32 %v933, %v934
    %937 = vrot.lane.b32.xlu0 %v935, 96
    %v938 = vpop.permute.xlu0 %937
    %940 = vst.msk [vmem:[#allocation3 + $0x6] sm:$0x1] %vm296, %v938
    %941 = vst.msk [vmem:[#allocation3 + $0xd] sm:$0x2] %vm298, %v938
    %s942 = scalar_lea.vmem [#allocation2], 7
    %v943 = vld [vmem:[%s942] ss:$8 sm:$0x3]
    %v944 = vsel %vm188, %v938, 0
    %946 = vmatprep.subr.mxu0 0.0
    %947 = vmatpush1.msra.mxu0 0.0
    %948 = vmatprep.subr.mxu0 0.0
    %949 = vmatpush1.msra.mxu0 0.0
    %950 = vmatprep.subr.mxu0 0.0
    %951 = vmatpush1.msra.mxu0 0.0
    %952 = vmatprep.subr.mxu0 0.0
    %953 = vmatpush1.msra.mxu0 0.0
    %954 = vmatprep.subr.mxu0 0.0
    %955 = vmatpush1.msra.mxu0 0.0
    %956 = vmatprep.subr.mxu0 0.0
    %957 = vmatpush1.msra.mxu0 0.0
    %958 = vmatprep.subr.mxu0 0.0
    %959 = vmatpush1.msra.mxu0 0.0
    %960 = vmatprep.subr.mxu0 0.0
    %961 = vmatpush1.msra.mxu0 0.0
    %962 = vmatprep.subr.mxu0 0.0
    %963 = vmatpush1.msra.mxu0 0.0
    %964 = vmatprep.subr.mxu0 0.0
    %965 = vmatpush1.msra.mxu0 0.0
    %966 = vmatprep.subr.mxu0 0.0
    %967 = vmatpush1.msra.mxu0 0.0
    %968 = vmatprep.subr.mxu0 0.0
    %969 = vmatpush1.msra.mxu0 0.0
    %970 = vmatprep.subr.mxu0 0.0
    %971 = vmatpush1.msra.mxu0 %v180
    %972 = vmatprep.subr.mxu0 0.0
    %973 = vmatpush1.msra.mxu0 %v179
    %974 = vmatprep.subr.mxu0 0.0
    %975 = vmatpush1.msra.mxu0 %v178
    %976 = vmatprep.subr.mxu0 0.0
    %977 = vmatpush1.msra.mxu0 %v177
    %978 = vmatprep.subr.mxu0 0.0
    %979 = vmatpush2.msra.mxu0 0.0
    %980 = vmatprep.subr.mxu0 0.0
    %981 = vmatpush2.msra.mxu0 0.0
    %982 = vmatprep.subr.mxu0 0.0
    %983 = vmatpush2.msra.mxu0 0.0
    %984 = vmatprep.subr.mxu0 0.0
    %985 = vmatpush2.msra.mxu0 0.0
    %986 = vmatprep.subr.mxu0 0.0
    %987 = vmatpush2.msra.mxu0 0.0
    %988 = vmatprep.subr.mxu0 0.0
    %989 = vmatpush2.msra.mxu0 0.0
    %990 = vmatprep.subr.mxu0 0.0
    %991 = vmatpush2.msra.mxu0 0.0
    %992 = vmatprep.subr.mxu0 0.0
    %993 = vmatpush2.msra.mxu0 0.0
    %994 = vmatprep.subr.mxu0 0.0
    %995 = vmatpush2.msra.mxu0 0.0
    %996 = vmatprep.subr.mxu0 0.0
    %997 = vmatpush2.msra.mxu0 0.0
    %998 = vmatprep.subr.mxu0 0.0
    %999 = vmatpush2.msra.mxu0 0.0
    %1000 = vmatprep.subr.mxu0 0.0
    %1001 = vmatpush2.msra.mxu0 0.0
    %1002 = vmatprep.subr.mxu0 0.0
    %1003 = vmatpush2.msra.mxu0 0.0
    %1004 = vmatprep.subr.mxu0 0.0
    %1005 = vmatpush2.msra.mxu0 0.0
    %1006 = vmatprep.subr.mxu0 0.0
    %1007 = vmatpush2.msra.mxu0 0.0
    %1008 = vmatprep.subr.mxu0 0.0
    %1009 = vmatpush2.msra.mxu0 0.0
    %1010 = vmatprep.mubr.f32.mxu0 0.0
    %1011 = vmatmul.mubr.f32.gmra.mxu0 %v944
    %v1012 = vpop.f32.mrf.mxu0
    %v1013 = vadd.f32 0.0, %v1012
    %v1014 = vpop.f32.mrf.mxu0
    %1015 = vdwg.mxu0
    %v1016 = vadd.f32 %v943, %v1013
    %v1017 = vxor.u32 %v1016, 2147483648
    %v1018 = vmul.f32 %v1017, 1.442695
    %v1019 = vpow.pop %v1018
    %v1020 = vadd.f32 %v1019, 1.0
    %v1021 = vrcp.pop %v1020
    %v1022 = vmul.f32 1.0, %v1021
    %v1023 = vadd.f32 %v1013, %v270
    %1025 = vrot.lane.b32.xlu0 %v1023, 64
    %v1026 = vpop.permute.xlu0 %1025
    %v1028 = vmul.f32 %v1022, %v1026
    %1030 = vrot.lane.b32.xlu0 %v1028, 64
    %v1031 = vpop.permute.xlu0 %1030
    %v1033 = vadd.f32 %v943, %v1031
    %v1034 = vtanh.pop %v1033
    %v1035 = vsub.f32 1.0, %v1022
    %1037 = vrot.lane.b32.xlu0 %v1034, 96
    %v1038 = vpop.permute.xlu0 %1037
    %v1040 = vmul.f32 %v1035, %v1038
    %v1041 = vmul.f32 %v1022, %v935
    %v1042 = vadd.f32 %v1040, %v1041
    %1044 = vrot.lane.b32.xlu0 %v1042, 96
    %v1045 = vpop.permute.xlu0 %1044
    %1047 = vst.msk [vmem:[#allocation3 + $0x7] sm:$0x1] %vm296, %v1045
    %1048 = vst.msk [vmem:[#allocation3 + $0xe] sm:$0x2] %vm298, %v1045
    %v1049 = vld [vmem:[#allocation3] sm:$0xff]
    %v1050 = vld [vmem:[#allocation3 + $0x8] sm:$0xff]
    %v1051 = vld [vmem:[#allocation9] sm:$0xff]
    %v1052 = vld [vmem:[#allocation9 + $0x8] sm:$0xff]
    %v1053 = vld [vmem:[#allocation9 + $0x10] sm:$0xff]
    %v1054 = vld [vmem:[#allocation9 + $0x18] sm:$0xff]
    %v1055 = vld [vmem:[%s6] sm:$0x1]
    %v1057 = vlaneseq
    %v1058 = vshrl.u32 %v1057, 7
    %v1059 = vsub.s32 0, %v1058
    %v1060 = vrot.slane %v1055, %v1059
    %v1063 = vsel %vm188, %v1049, 0
    %v1066 = vsel %vm188, %v1050, 0
    %1068 = vmatprep.subr.mxu0 0.0
    %1069 = vmatpush1.msra.mxu0 0.0
    %1070 = vmatprep.subr.mxu0 0.0
    %1071 = vmatpush1.msra.mxu0 0.0
    %1072 = vmatprep.subr.mxu0 0.0
    %1073 = vmatpush1.msra.mxu0 0.0
    %1074 = vmatprep.subr.mxu0 0.0
    %1075 = vmatpush1.msra.mxu0 0.0
    %1076 = vmatprep.subr.mxu0 0.0
    %1077 = vmatpush1.msra.mxu0 0.0
    %1078 = vmatprep.subr.mxu0 0.0
    %1079 = vmatpush1.msra.mxu0 0.0
    %1080 = vmatprep.subr.mxu0 0.0
    %1081 = vmatpush1.msra.mxu0 0.0
    %1082 = vmatprep.subr.mxu0 0.0
    %1083 = vmatpush1.msra.mxu0 0.0
    %1084 = vmatprep.subr.mxu0 0.0
    %1085 = vmatpush1.msra.mxu0 0.0
    %1086 = vmatprep.subr.mxu0 0.0
    %1087 = vmatpush1.msra.mxu0 0.0
    %1088 = vmatprep.subr.mxu0 0.0
    %1089 = vmatpush1.msra.mxu0 0.0
    %1090 = vmatprep.subr.mxu0 0.0
    %1091 = vmatpush1.msra.mxu0 0.0
    %1092 = vmatprep.subr.mxu0 0.0
    %1093 = vmatpush1.msra.mxu0 %v1054
    %1094 = vmatprep.subr.mxu0 0.0
    %1095 = vmatpush1.msra.mxu0 %v1053
    %1096 = vmatprep.subr.mxu0 0.0
    %1097 = vmatpush1.msra.mxu0 %v1052
    %1098 = vmatprep.subr.mxu0 0.0
    %1099 = vmatpush1.msra.mxu0 %v1051
    %1100 = vmatprep.subr.mxu0 0.0
    %1101 = vmatpush2.msra.mxu0 0.0
    %1102 = vmatprep.subr.mxu0 0.0
    %1103 = vmatpush2.msra.mxu0 0.0
    %1104 = vmatprep.subr.mxu0 0.0
    %1105 = vmatpush2.msra.mxu0 0.0
    %1106 = vmatprep.subr.mxu0 0.0
    %1107 = vmatpush2.msra.mxu0 0.0
    %1108 = vmatprep.subr.mxu0 0.0
    %1109 = vmatpush2.msra.mxu0 0.0
    %1110 = vmatprep.subr.mxu0 0.0
    %1111 = vmatpush2.msra.mxu0 0.0
    %1112 = vmatprep.subr.mxu0 0.0
    %1113 = vmatpush2.msra.mxu0 0.0
    %1114 = vmatprep.subr.mxu0 0.0
    %1115 = vmatpush2.msra.mxu0 0.0
    %1116 = vmatprep.subr.mxu0 0.0
    %1117 = vmatpush2.msra.mxu0 0.0
    %1118 = vmatprep.subr.mxu0 0.0
    %1119 = vmatpush2.msra.mxu0 0.0
    %1120 = vmatprep.subr.mxu0 0.0
    %1121 = vmatpush2.msra.mxu0 0.0
    %1122 = vmatprep.subr.mxu0 0.0
    %1123 = vmatpush2.msra.mxu0 0.0
    %1124 = vmatprep.subr.mxu0 0.0
    %1125 = vmatpush2.msra.mxu0 0.0
    %1126 = vmatprep.subr.mxu0 0.0
    %1127 = vmatpush2.msra.mxu0 0.0
    %1128 = vmatprep.subr.mxu0 0.0
    %1129 = vmatpush2.msra.mxu0 0.0
    %1130 = vmatprep.subr.mxu0 0.0
    %1131 = vmatpush2.msra.mxu0 0.0
    %1132 = vmatprep.mubr.f32.mxu0 0.0
    %1133 = vmatmul.mubr.f32.gmra.mxu0 %v1063
    %v1134 = vpop.f32.mrf.mxu0
    %v1135 = vadd.f32 %v1060, %v1134
    %v1136 = vpop.f32.mrf.mxu0
    %1137 = vmatprep.mubr.f32.mxu0 0.0
    %1138 = vmatmul.mubr.f32.gmra.mxu0 %v1066
    %v1139 = vpop.f32.mrf.mxu0
    %v1140 = vadd.f32 %v1060, %v1139
    %v1141 = vpop.f32.mrf.mxu0
    %1142 = vdwg.mxu0
    %1143 = vst [vmem:[%s7] sm:$0xff] %v1135
    %1144 = vst [vmem:[%s7 + $0x8] sm:$0xff] %v1140
    // Predicated region
    $region46: #{sst_sequence_encoder_forward.1} parent=1 // pred_check
      _
    $region47: #{sst_sequence_encoder_forward.1} parent=1 // pred_check_branch
      %1146 = sbr.rel (0) target = $region49
    $region48: #{sst_sequence_encoder_forward.1} parent=1 // pred_region
      _
    $region49: #{sst_sequence_encoder_forward.1} parent=1 // pred_fallthru
      _
    // Predicated region
    $region50: #{sst_sequence_encoder_forward.1} parent=1 // pred_check
      _
    $region51: #{sst_sequence_encoder_forward.1} parent=1 // pred_check_branch
      %1148 = sbr.rel (0) target = $region53
    $region52: #{sst_sequence_encoder_forward.1} parent=1 // pred_region
      _
    $region53: #{sst_sequence_encoder_forward.1} parent=1 // pred_fallthru
      _
    %1149 = vsyncpa [#allocation5], 1
    %1150 = vsyncpa [#allocation7], 1
    %1151 = vsyncpa [#allocation10], 1

</llo_original>
